<compile_context>
chip_gen: v6e
topology: v6e:2x2x1
jax: 0.10.0
libtpu: 0.0.40
codegen_flags: <defaults>
</compile_context>

<pallas_src>
import functools
import math

import jax
import jax.numpy as jnp
from jax.experimental import pallas as pl
from jax.experimental.pallas import tpu as pltpu

_EPS = 1e-6


def _rmsnorm_f32(v, gain_ref):
    """RMSNorm with the reduction done in f32."""
    vf = v.astype(jnp.float32)
    ms = jnp.mean(vf * vf, axis=-1, keepdims=True)
    return vf * jax.lax.rsqrt(ms + _EPS) * gain_ref[...].astype(jnp.float32)


def dense_block_kernel(x_ref, gan_ref, wqkv_ref, wo_ref, gfn_ref, wgu_ref,
                       wd_ref, out_ref, q_scr, kv_scr, attn_scr,
                       *, num_heads, tile):
    si = pl.program_id(1)
    f32 = jnp.float32
    dt = x_ref.dtype                          # MXU operand dtype (bf16-ready)
    S, D = x_ref.shape[1], x_ref.shape[2]
    ts = tile
    dh = D // num_heads
    scale = 1.0 / math.sqrt(dh)

    # ---- Q|K|V projection for the whole sequence: one fat (S,D)@(D,3D) matmul
    #      per batch element (si == 0); results stay resident in VMEM scratch
    #      and are reused by every query-row tile (no per-tile recompute).
    @pl.when(si == 0)
    def _():
        xn_full = _rmsnorm_f32(x_ref[0], gan_ref)                     # (S, D) f32
        qkv = jnp.dot(xn_full.astype(dt), wqkv_ref[...],
                      preferred_element_type=f32)                     # (S, 3D)
        q_scr[...] = qkv[:, :D].astype(q_scr.dtype)
        kv_scr[...] = qkv[:, D:].astype(kv_scr.dtype)

    # ---- this query-row tile, sliced from the resident full-seq x block
    #      (no second x input / duplicate DMA stream).
    row0 = pl.multiple_of(si * ts, ts)
    x_t = x_ref[0, pl.ds(row0, ts), :]                                # (ts, D)
    q = q_scr[pl.ds(row0, ts), :]                                     # (ts, D)
    kv = kv_scr[...]                                                  # (S, 2D)

    # ---- attention branch: h = x + attn(attn_norm(x))
    for h_idx in range(num_heads):                                    # static unroll
        lo = h_idx * dh
        qh = q[:, lo:lo + dh]                                         # (ts, dh)
        kh = kv[:, lo:lo + dh]                                        # (S, dh)
        vh = kv[:, D + lo:D + lo + dh]                                # (S, dh)
        # scores = q @ k.T via dot_general contracting the head dims, f32 acc.
        s = jax.lax.dot_general(qh, kh, (((1,), (1,)), ((), ())),
                                preferred_element_type=f32) * scale   # (ts, S)
        m = jnp.max(s, axis=-1, keepdims=True)
        p = jnp.exp(s - m)
        l = jnp.sum(p, axis=-1, keepdims=True)
        oh = jnp.dot(p.astype(dt), vh, preferred_element_type=f32)    # (ts, dh)
        # Write each head straight into the VMEM accumulator: no lane-axis
        # concatenate/relayout, bounded live ranges.
        attn_scr[:, lo:lo + dh] = oh / l
        # (pl.reciprocal(l, approx=True) would move this divide onto the EUP
        #  slot; kept exact here for tight f32 parity with the reference.)

    attn = jnp.dot(attn_scr[...].astype(dt), wo_ref[...],
                   preferred_element_type=f32)                        # (ts, D)
    h_res = x_t.astype(f32) + attn

    # ---- FFN branch: out = h + ffn(ffn_norm(x))
    #      NOTE: uses ffn_norm(x), not ffn_norm(h), exactly as in PyTorch code.
    hid = wd_ref.shape[0]
    xn2 = _rmsnorm_f32(x_t, gfn_ref)
    gu = jnp.dot(xn2.astype(dt), wgu_ref[...],
                 preferred_element_type=f32)                          # (ts, 2*hid)
    g = gu[:, :hid]
    u = gu[:, hid:]
    act = g * jax.nn.sigmoid(g) * u                                   # SwiGLU, f32
    ff = jnp.dot(act.astype(dt), wd_ref[...],
                 preferred_element_type=f32)                          # (ts, D)

    out_ref[0] = (h_res + ff).astype(out_ref.dtype)


def dense_block(x, params, num_heads):
    B, S, D = x.shape
    assert D % num_heads == 0, "model dim must divide num_heads"
    hidden = params["w_gate"].shape[1]

    # Pre-fused weights (a real model would store them fused): one (D, 3D)
    # Q|K|V projection and one (D, 2*hidden) gate|up projection.
    w_qkv = jnp.concatenate([params["wq"], params["wk"], params["wv"]], axis=1)
    w_gu = jnp.concatenate([params["w_gate"], params["w_up"]], axis=1)
    gan = params["attn_norm"].reshape(1, D)
    gfn = params["ffn_norm"].reshape(1, D)

    # Query-row tile size: multiple grid points per batch element when S is
    # large; falls back to the full sequence for small / non-divisible S.
    ts = S
    for cand in (512, 256, 128):
        if S >= cand and S % cand == 0:
            ts = cand
            break
    nq = S // ts

    kernel = functools.partial(dense_block_kernel, num_heads=num_heads, tile=ts)

    def const(shape):
        # Weights / gains: constant block index -> fetched once, kept resident.
        n = len(shape)
        return pl.BlockSpec(shape, lambda b, si, _n=n: (0,) * _n)

    in_specs = [
        pl.BlockSpec((1, S, D), lambda b, si: (b, 0, 0)),  # x, full sequence
        const((1, D)),                                     # attn_norm gain
        const((D, 3 * D)),                                 # [wq | wk | wv]
        const((D, D)),                                     # wo
        const((1, D)),                                     # ffn_norm gain
        const((D, 2 * hidden)),                            # [w_gate | w_up]
        const((hidden, D)),                                # w_down
    ]

    # Advisory cost estimate so XLA can schedule/overlap around the kernel.
    itemsize = jnp.dtype(x.dtype).itemsize
    proj_flops = 2 * B * S * D * (3 * D + D)              # q|k|v, out-proj
    attn_flops = 4 * B * S * S * D                        # scores + p@v
    ffn_flops = 2 * B * S * D * 2 * hidden + 2 * B * S * hidden * D
    weight_elems = 3 * D * D + D * D + D * 2 * hidden + hidden * D + 2 * D
    cost = pl.CostEstimate(
        flops=int(proj_flops + attn_flops + ffn_flops),
        transcendentals=int(B * num_heads * S * S + B * S * hidden + 4 * B * S),
        bytes_accessed=int((2 * B * S * D + weight_elems) * itemsize),
    )

    return pl.pallas_call(
        kernel,
        out_shape=jax.ShapeDtypeStruct((B, S, D), x.dtype),
        grid=(B, nq),
        in_specs=in_specs,
        out_specs=pl.BlockSpec((1, ts, D), lambda b, si: (b, si, 0)),
        scratch_shapes=[
            pltpu.VMEM((S, D), x.dtype),        # resident Q for current batch
            pltpu.VMEM((S, 2 * D), x.dtype),    # resident K|V for current batch
            pltpu.VMEM((ts, D), jnp.float32),   # per-head attention accumulator
        ],
        compiler_params=pltpu.CompilerParams(
            # Batch axis shards across cores; the query-tile axis carries the
            # Q|K|V scratch (written at si == 0), so it must stay sequential.
            dimension_semantics=("parallel", "arbitrary"),
            vmem_limit_bytes=64 * 1024 * 1024,
        ),
        cost_estimate=cost,
    )(x, gan, w_qkv, params["wo"], gfn, w_gu, params["w_down"])


def dense_block_ref(x, params, num_heads):
    """Pure-JAX reference with identical semantics."""
    x = x.astype(jnp.float32)
    B, S, D = x.shape
    dh = D // num_heads

    def rmsnorm(v, g):
        return v * jax.lax.rsqrt(jnp.mean(v * v, -1, keepdims=True) + _EPS) * g

    xn = rmsnorm(x, params["attn_norm"])
    q = (xn @ params["wq"]).reshape(B, S, num_heads, dh).transpose(0, 2, 1, 3)
    k = (xn @ params["wk"]).reshape(B, S, num_heads, dh).transpose(0, 2, 1, 3)
    v = (xn @ params["wv"]).reshape(B, S, num_heads, dh).transpose(0, 2, 1, 3)
    s = jnp.einsum("bhqd,bhkd->bhqk", q, k) / math.sqrt(dh)
    p = jax.nn.softmax(s, axis=-1)
    o = jnp.einsum("bhqk,bhkd->bhqd", p, v).transpose(0, 2, 1, 3).reshape(B, S, D)
    h = x + o @ params["wo"]

    xn2 = rmsnorm(x, params["ffn_norm"])
    g = xn2 @ params["w_gate"]
    u = xn2 @ params["w_up"]
    ff = (jax.nn.silu(g) * u) @ params["w_down"]
    return h + ff


if __name__ == "__main__":
    B, S, D, H = 2, 8, 32, 4          # batch, seq, dim, num_heads
    HID = 4 * D                        # gated-FFN hidden dim

    key = jax.random.PRNGKey(0)
    ks = jax.random.split(key, 9)
    scale = 0.05
    params = {
        "attn_norm": jnp.ones((1, D), jnp.float32),
        "ffn_norm":  jnp.ones((1, D), jnp.float32),
        "wq": scale * jax.random.normal(ks[0], (D, D), jnp.float32),
        "wk": scale * jax.random.normal(ks[1], (D, D), jnp.float32),
        "wv": scale * jax.random.normal(ks[2], (D, D), jnp.float32),
        "wo": scale * jax.random.normal(ks[3], (D, D), jnp.float32),
        "w_gate": scale * jax.random.normal(ks[4], (D, HID), jnp.float32),
        "w_up":   scale * jax.random.normal(ks[5], (D, HID), jnp.float32),
        "w_down": scale * jax.random.normal(ks[6], (HID, D), jnp.float32),
    }
    x = jax.random.normal(ks[7], (B, S, D), jnp.float32)

    out = dense_block(x, params, H)
    out = jax.block_until_ready(out)

    ref = dense_block_ref(x, params, H)
    assert out.shape == (B, S, D) and out.dtype == x.dtype
    assert jnp.allclose(out, ref, atol=1e-4, rtol=1e-4), \
        f"max abs err {jnp.max(jnp.abs(out - ref))}"
    print("KERNEL_OK")
</pallas_src>

<mosaic_0001>
module attributes {stable_mosaic.version = 11 : i64} {
  func.func @dense_block_kernel(%arg0: i32, %arg1: i32, %arg2: memref<1x8x32xf32, #tpu.memory_space<vmem>>, %arg3: memref<1x32xf32, #tpu.memory_space<vmem>>, %arg4: memref<32x96xf32, #tpu.memory_space<vmem>>, %arg5: memref<32x32xf32, #tpu.memory_space<vmem>>, %arg6: memref<1x32xf32, #tpu.memory_space<vmem>>, %arg7: memref<32x256xf32, #tpu.memory_space<vmem>>, %arg8: memref<128x32xf32, #tpu.memory_space<vmem>>, %arg9: memref<1x8x32xf32, #tpu.memory_space<vmem>>, %arg10: memref<8x32xf32, #tpu.memory_space<vmem>>, %arg11: memref<8x64xf32, #tpu.memory_space<vmem>>, %arg12: memref<8x32xf32, #tpu.memory_space<vmem>>) attributes {dimension_semantics = [#tpu.dimension_semantics<parallel>, #tpu.dimension_semantics<arbitrary>], iteration_bounds = array<i64: 2, 1>, scalar_prefetch = 0 : i64, scratch_operands = 3 : i64, tpu.core_type = #tpu.core_type<tc>, window_params = [{transform_indices = @transform_0, window_bounds = array<i64: 1, 8, 32>}, {pipeline_mode = #tpu.pipeline_mode<synchronous>, transform_indices = @transform_1, window_bounds = array<i64: 1, 32>}, {pipeline_mode = #tpu.pipeline_mode<synchronous>, transform_indices = @transform_2, window_bounds = array<i64: 32, 96>}, {pipeline_mode = #tpu.pipeline_mode<synchronous>, transform_indices = @transform_3, window_bounds = array<i64: 32, 32>}, {pipeline_mode = #tpu.pipeline_mode<synchronous>, transform_indices = @transform_4, window_bounds = array<i64: 1, 32>}, {pipeline_mode = #tpu.pipeline_mode<synchronous>, transform_indices = @transform_5, window_bounds = array<i64: 32, 256>}, {pipeline_mode = #tpu.pipeline_mode<synchronous>, transform_indices = @transform_6, window_bounds = array<i64: 128, 32>}, {transform_indices = @transform_7, window_bounds = array<i64: 1, 8, 32>}]} {
    %c0_i32 = arith.constant 0 : i32
    %0 = arith.cmpi eq, %arg1, %c0_i32 : i32
    %1 = arith.extui %0 : i1 to i32
    %c0_i32_0 = arith.constant 0 : i32
    %2 = arith.cmpi ne, %1, %c0_i32_0 : i32
    scf.if %2 {
      %c0_49 = arith.constant 0 : index
      %c0_50 = arith.constant 0 : index
      %c0_51 = arith.constant 0 : index
      %113 = vector.load %arg2[%c0_49, %c0_50, %c0_51] : memref<1x8x32xf32, #tpu.memory_space<vmem>>, vector<1x8x32xf32>
      %114 = vector.shape_cast %113 : vector<1x8x32xf32> to vector<8x32xf32>
      %115 = arith.mulf %114, %114 : vector<8x32xf32>
      %cst_52 = arith.constant dense<0.000000e+00> : vector<8xf32>
      %116 = vector.multi_reduction <add>, %115, %cst_52 [1] : vector<8x32xf32> to vector<8xf32>
      %117 = vector.shape_cast %116 : vector<8xf32> to vector<8x1xf32>
      %cst_53 = arith.constant 3.200000e+01 : f32
      %118 = vector.broadcast %cst_53 : f32 to vector<8x1xf32>
      %119 = arith.divf %117, %118 : vector<8x1xf32>
      %cst_54 = arith.constant 9.99999997E-7 : f32
      %120 = vector.broadcast %cst_54 : f32 to vector<8x1xf32>
      %121 = arith.addf %119, %120 : vector<8x1xf32>
      %122 = math.rsqrt %121 : vector<8x1xf32>
      %123 = vector.broadcast %122 : vector<8x1xf32> to vector<8x32xf32>
      %124 = arith.mulf %114, %123 : vector<8x32xf32>
      %c0_55 = arith.constant 0 : index
      %c0_56 = arith.constant 0 : index
      %125 = vector.load %arg3[%c0_55, %c0_56] : memref<1x32xf32, #tpu.memory_space<vmem>>, vector<1x32xf32>
      %126 = vector.broadcast %125 : vector<1x32xf32> to vector<8x32xf32>
      %127 = arith.mulf %124, %126 : vector<8x32xf32>
      %c0_57 = arith.constant 0 : index
      %c0_58 = arith.constant 0 : index
      %128 = vector.load %arg4[%c0_57, %c0_58] : memref<32x96xf32, #tpu.memory_space<vmem>>, vector<32x96xf32>
      %cst_59 = arith.constant dense<0.000000e+00> : vector<8x96xf32>
      %129 = tpu.matmul %127, %128, %cst_59 {dimension_numbers = #tpu.dot_dimension_numbers<[1], [0], [0], [1], [0, 0, 1, 1], [], []>} : vector<8x32xf32>, vector<32x96xf32>, vector<8x96xf32> -> vector<8x96xf32>
      %130 = vector.extract_strided_slice %129 {offsets = [0, 0], sizes = [8, 32], strides = [1, 1]} : vector<8x96xf32> to vector<8x32xf32>
      %c0_60 = arith.constant 0 : index
      %c0_61 = arith.constant 0 : index
      %131 = vector.load %arg10[%c0_60, %c0_61] : memref<8x32xf32, #tpu.memory_space<vmem>>, vector<8x32xf32>
      tpu.vector_store %arg10[%c0_60, %c0_61], %130 {strides = array<i32>} : memref<8x32xf32, #tpu.memory_space<vmem>>, vector<8x32xf32>,
      %132 = vector.extract_strided_slice %129 {offsets = [0, 32], sizes = [8, 64], strides = [1, 1]} : vector<8x96xf32> to vector<8x64xf32>
      %c0_62 = arith.constant 0 : index
      %c0_63 = arith.constant 0 : index
      %133 = vector.load %arg11[%c0_62, %c0_63] : memref<8x64xf32, #tpu.memory_space<vmem>>, vector<8x64xf32>
      tpu.vector_store %arg11[%c0_62, %c0_63], %132 {strides = array<i32>} : memref<8x64xf32, #tpu.memory_space<vmem>>, vector<8x64xf32>,
    } else {
    }
    %c8_i32 = arith.constant 8 : i32
    %3 = arith.muli %arg1, %c8_i32 : i32
    %4 = tpu.assume_multiple %3, 8 : i32
    %c0 = arith.constant 0 : index
    %5 = arith.index_cast %4 : i32 to index
    %c0_1 = arith.constant 0 : index
    %6 = vector.load %arg2[%c0, %5, %c0_1] : memref<1x8x32xf32, #tpu.memory_space<vmem>>, vector<1x8x32xf32>
    %7 = vector.shape_cast %6 : vector<1x8x32xf32> to vector<8x32xf32>
    %8 = arith.index_cast %4 : i32 to index
    %c0_2 = arith.constant 0 : index
    %9 = vector.load %arg10[%8, %c0_2] : memref<8x32xf32, #tpu.memory_space<vmem>>, vector<8x32xf32>
    %c0_3 = arith.constant 0 : index
    %c0_4 = arith.constant 0 : index
    %10 = vector.load %arg11[%c0_3, %c0_4] : memref<8x64xf32, #tpu.memory_space<vmem>>, vector<8x64xf32>
    %11 = vector.extract_strided_slice %9 {offsets = [0, 0], sizes = [8, 8], strides = [1, 1]} : vector<8x32xf32> to vector<8x8xf32>
    %12 = vector.extract_strided_slice %10 {offsets = [0, 0], sizes = [8, 8], strides = [1, 1]} : vector<8x64xf32> to vector<8x8xf32>
    %13 = vector.extract_strided_slice %10 {offsets = [0, 32], sizes = [8, 8], strides = [1, 1]} : vector<8x64xf32> to vector<8x8xf32>
    %cst = arith.constant dense<0.000000e+00> : vector<8x8xf32>
    %14 = tpu.matmul %11, %12, %cst {dimension_numbers = #tpu.dot_dimension_numbers<[1], [1], [0], [0], [0, 0, 1, 0], [], []>} : vector<8x8xf32>, vector<8x8xf32>, vector<8x8xf32> -> vector<8x8xf32>
    %cst_5 = arith.constant 0.353553385 : f32
    %15 = vector.broadcast %cst_5 : f32 to vector<8x8xf32>
    %16 = arith.mulf %14, %15 : vector<8x8xf32>
    %cst_6 = arith.constant dense<0xFF800000> : vector<8xf32>
    %17 = vector.multi_reduction <maximumf>, %16, %cst_6 [1] : vector<8x8xf32> to vector<8xf32>
    %18 = vector.shape_cast %17 : vector<8xf32> to vector<8x1xf32>
    %19 = vector.broadcast %18 : vector<8x1xf32> to vector<8x8xf32>
    %20 = arith.subf %16, %19 : vector<8x8xf32>
    %21 = math.exp %20 : vector<8x8xf32>
    %cst_7 = arith.constant dense<0.000000e+00> : vector<8xf32>
    %22 = vector.multi_reduction <add>, %21, %cst_7 [1] : vector<8x8xf32> to vector<8xf32>
    %23 = vector.shape_cast %22 : vector<8xf32> to vector<8x1xf32>
    %cst_8 = arith.constant dense<0.000000e+00> : vector<8x8xf32>
    %24 = tpu.matmul %21, %13, %cst_8 {dimension_numbers = #tpu.dot_dimension_numbers<[1], [0], [0], [1], [0, 0, 1, 1], [], []>} : vector<8x8xf32>, vector<8x8xf32>, vector<8x8xf32> -> vector<8x8xf32>
    %25 = vector.broadcast %23 : vector<8x1xf32> to vector<8x8xf32>
    %26 = arith.divf %24, %25 : vector<8x8xf32>
    %c0_9 = arith.constant 0 : index
    %c0_10 = arith.constant 0 : index
    %27 = vector.load %arg12[%c0_9, %c0_10] : memref<8x32xf32, #tpu.memory_space<vmem>>, vector<8x8xf32>
    tpu.vector_store %arg12[%c0_9, %c0_10], %26 {strides = array<i32>} : memref<8x32xf32, #tpu.memory_space<vmem>>, vector<8x8xf32>,
    %28 = vector.extract_strided_slice %9 {offsets = [0, 8], sizes = [8, 8], strides = [1, 1]} : vector<8x32xf32> to vector<8x8xf32>
    %29 = vector.extract_strided_slice %10 {offsets = [0, 8], sizes = [8, 8], strides = [1, 1]} : vector<8x64xf32> to vector<8x8xf32>
    %30 = vector.extract_strided_slice %10 {offsets = [0, 40], sizes = [8, 8], strides = [1, 1]} : vector<8x64xf32> to vector<8x8xf32>
    %cst_11 = arith.constant dense<0.000000e+00> : vector<8x8xf32>
    %31 = tpu.matmul %28, %29, %cst_11 {dimension_numbers = #tpu.dot_dimension_numbers<[1], [1], [0], [0], [0, 0, 1, 0], [], []>} : vector<8x8xf32>, vector<8x8xf32>, vector<8x8xf32> -> vector<8x8xf32>
    %cst_12 = arith.constant 0.353553385 : f32
    %32 = vector.broadcast %cst_12 : f32 to vector<8x8xf32>
    %33 = arith.mulf %31, %32 : vector<8x8xf32>
    %cst_13 = arith.constant dense<0xFF800000> : vector<8xf32>
    %34 = vector.multi_reduction <maximumf>, %33, %cst_13 [1] : vector<8x8xf32> to vector<8xf32>
    %35 = vector.shape_cast %34 : vector<8xf32> to vector<8x1xf32>
    %36 = vector.broadcast %35 : vector<8x1xf32> to vector<8x8xf32>
    %37 = arith.subf %33, %36 : vector<8x8xf32>
    %38 = math.exp %37 : vector<8x8xf32>
    %cst_14 = arith.constant dense<0.000000e+00> : vector<8xf32>
    %39 = vector.multi_reduction <add>, %38, %cst_14 [1] : vector<8x8xf32> to vector<8xf32>
    %40 = vector.shape_cast %39 : vector<8xf32> to vector<8x1xf32>
    %cst_15 = arith.constant dense<0.000000e+00> : vector<8x8xf32>
    %41 = tpu.matmul %38, %30, %cst_15 {dimension_numbers = #tpu.dot_dimension_numbers<[1], [0], [0], [1], [0, 0, 1, 1], [], []>} : vector<8x8xf32>, vector<8x8xf32>, vector<8x8xf32> -> vector<8x8xf32>
    %42 = vector.broadcast %40 : vector<8x1xf32> to vector<8x8xf32>
    %43 = arith.divf %41, %42 : vector<8x8xf32>
    %c0_16 = arith.constant 0 : index
    %c8 = arith.constant 8 : index
    %44 = vector.load %arg12[%c0_16, %c8] : memref<8x32xf32, #tpu.memory_space<vmem>>, vector<8x8xf32>
    tpu.vector_store %arg12[%c0_16, %c8], %43 {strides = array<i32>} : memref<8x32xf32, #tpu.memory_space<vmem>>, vector<8x8xf32>,
    %45 = vector.extract_strided_slice %9 {offsets = [0, 16], sizes = [8, 8], strides = [1, 1]} : vector<8x32xf32> to vector<8x8xf32>
    %46 = vector.extract_strided_slice %10 {offsets = [0, 16], sizes = [8, 8], strides = [1, 1]} : vector<8x64xf32> to vector<8x8xf32>
    %47 = vector.extract_strided_slice %10 {offsets = [0, 48], sizes = [8, 8], strides = [1, 1]} : vector<8x64xf32> to vector<8x8xf32>
    %cst_17 = arith.constant dense<0.000000e+00> : vector<8x8xf32>
    %48 = tpu.matmul %45, %46, %cst_17 {dimension_numbers = #tpu.dot_dimension_numbers<[1], [1], [0], [0], [0, 0, 1, 0], [], []>} : vector<8x8xf32>, vector<8x8xf32>, vector<8x8xf32> -> vector<8x8xf32>
    %cst_18 = arith.constant 0.353553385 : f32
    %49 = vector.broadcast %cst_18 : f32 to vector<8x8xf32>
    %50 = arith.mulf %48, %49 : vector<8x8xf32>
    %cst_19 = arith.constant dense<0xFF800000> : vector<8xf32>
    %51 = vector.multi_reduction <maximumf>, %50, %cst_19 [1] : vector<8x8xf32> to vector<8xf32>
    %52 = vector.shape_cast %51 : vector<8xf32> to vector<8x1xf32>
    %53 = vector.broadcast %52 : vector<8x1xf32> to vector<8x8xf32>
    %54 = arith.subf %50, %53 : vector<8x8xf32>
    %55 = math.exp %54 : vector<8x8xf32>
    %cst_20 = arith.constant dense<0.000000e+00> : vector<8xf32>
    %56 = vector.multi_reduction <add>, %55, %cst_20 [1] : vector<8x8xf32> to vector<8xf32>
    %57 = vector.shape_cast %56 : vector<8xf32> to vector<8x1xf32>
    %cst_21 = arith.constant dense<0.000000e+00> : vector<8x8xf32>
    %58 = tpu.matmul %55, %47, %cst_21 {dimension_numbers = #tpu.dot_dimension_numbers<[1], [0], [0], [1], [0, 0, 1, 1], [], []>} : vector<8x8xf32>, vector<8x8xf32>, vector<8x8xf32> -> vector<8x8xf32>
    %59 = vector.broadcast %57 : vector<8x1xf32> to vector<8x8xf32>
    %60 = arith.divf %58, %59 : vector<8x8xf32>
    %c0_22 = arith.constant 0 : index
    %c16 = arith.constant 16 : index
    %61 = vector.load %arg12[%c0_22, %c16] : memref<8x32xf32, #tpu.memory_space<vmem>>, vector<8x8xf32>
    tpu.vector_store %arg12[%c0_22, %c16], %60 {strides = array<i32>} : memref<8x32xf32, #tpu.memory_space<vmem>>, vector<8x8xf32>,
    %62 = vector.extract_strided_slice %9 {offsets = [0, 24], sizes = [8, 8], strides = [1, 1]} : vector<8x32xf32> to vector<8x8xf32>
    %63 = vector.extract_strided_slice %10 {offsets = [0, 24], sizes = [8, 8], strides = [1, 1]} : vector<8x64xf32> to vector<8x8xf32>
    %64 = vector.extract_strided_slice %10 {offsets = [0, 56], sizes = [8, 8], strides = [1, 1]} : vector<8x64xf32> to vector<8x8xf32>
    %cst_23 = arith.constant dense<0.000000e+00> : vector<8x8xf32>
    %65 = tpu.matmul %62, %63, %cst_23 {dimension_numbers = #tpu.dot_dimension_numbers<[1], [1], [0], [0], [0, 0, 1, 0], [], []>} : vector<8x8xf32>, vector<8x8xf32>, vector<8x8xf32> -> vector<8x8xf32>
    %cst_24 = arith.constant 0.353553385 : f32
    %66 = vector.broadcast %cst_24 : f32 to vector<8x8xf32>
    %67 = arith.mulf %65, %66 : vector<8x8xf32>
    %cst_25 = arith.constant dense<0xFF800000> : vector<8xf32>
    %68 = vector.multi_reduction <maximumf>, %67, %cst_25 [1] : vector<8x8xf32> to vector<8xf32>
    %69 = vector.shape_cast %68 : vector<8xf32> to vector<8x1xf32>
    %70 = vector.broadcast %69 : vector<8x1xf32> to vector<8x8xf32>
    %71 = arith.subf %67, %70 : vector<8x8xf32>
    %72 = math.exp %71 : vector<8x8xf32>
    %cst_26 = arith.constant dense<0.000000e+00> : vector<8xf32>
    %73 = vector.multi_reduction <add>, %72, %cst_26 [1] : vector<8x8xf32> to vector<8xf32>
    %74 = vector.shape_cast %73 : vector<8xf32> to vector<8x1xf32>
    %cst_27 = arith.constant dense<0.000000e+00> : vector<8x8xf32>
    %75 = tpu.matmul %72, %64, %cst_27 {dimension_numbers = #tpu.dot_dimension_numbers<[1], [0], [0], [1], [0, 0, 1, 1], [], []>} : vector<8x8xf32>, vector<8x8xf32>, vector<8x8xf32> -> vector<8x8xf32>
    %76 = vector.broadcast %74 : vector<8x1xf32> to vector<8x8xf32>
    %77 = arith.divf %75, %76 : vector<8x8xf32>
    %c0_28 = arith.constant 0 : index
    %c24 = arith.constant 24 : index
    %78 = vector.load %arg12[%c0_28, %c24] : memref<8x32xf32, #tpu.memory_space<vmem>>, vector<8x8xf32>
    tpu.vector_store %arg12[%c0_28, %c24], %77 {strides = array<i32>} : memref<8x32xf32, #tpu.memory_space<vmem>>, vector<8x8xf32>,
    %c0_29 = arith.constant 0 : index
    %c0_30 = arith.constant 0 : index
    %79 = vector.load %arg12[%c0_29, %c0_30] : memref<8x32xf32, #tpu.memory_space<vmem>>, vector<8x32xf32>
    %c0_31 = arith.constant 0 : index
    %c0_32 = arith.constant 0 : index
    %80 = vector.load %arg5[%c0_31, %c0_32] : memref<32x32xf32, #tpu.memory_space<vmem>>, vector<32x32xf32>
    %cst_33 = arith.constant dense<0.000000e+00> : vector<8x32xf32>
    %81 = tpu.matmul %79, %80, %cst_33 {dimension_numbers = #tpu.dot_dimension_numbers<[1], [0], [0], [1], [0, 0, 1, 1], [], []>} : vector<8x32xf32>, vector<32x32xf32>, vector<8x32xf32> -> vector<8x32xf32>
    %82 = arith.addf %7, %81 : vector<8x32xf32>
    %83 = arith.mulf %7, %7 : vector<8x32xf32>
    %cst_34 = arith.constant dense<0.000000e+00> : vector<8xf32>
    %84 = vector.multi_reduction <add>, %83, %cst_34 [1] : vector<8x32xf32> to vector<8xf32>
    %85 = vector.shape_cast %84 : vector<8xf32> to vector<8x1xf32>
    %cst_35 = arith.constant 3.200000e+01 : f32
    %86 = vector.broadcast %cst_35 : f32 to vector<8x1xf32>
    %87 = arith.divf %85, %86 : vector<8x1xf32>
    %cst_36 = arith.constant 9.99999997E-7 : f32
    %88 = vector.broadcast %cst_36 : f32 to vector<8x1xf32>
    %89 = arith.addf %87, %88 : vector<8x1xf32>
    %90 = math.rsqrt %89 : vector<8x1xf32>
    %91 = vector.broadcast %90 : vector<8x1xf32> to vector<8x32xf32>
    %92 = arith.mulf %7, %91 : vector<8x32xf32>
    %c0_37 = arith.constant 0 : index
    %c0_38 = arith.constant 0 : index
    %93 = vector.load %arg6[%c0_37, %c0_38] : memref<1x32xf32, #tpu.memory_space<vmem>>, vector<1x32xf32>
    %94 = vector.broadcast %93 : vector<1x32xf32> to vector<8x32xf32>
    %95 = arith.mulf %92, %94 : vector<8x32xf32>
    %c0_39 = arith.constant 0 : index
    %c0_40 = arith.constant 0 : index
    %96 = vector.load %arg7[%c0_39, %c0_40] : memref<32x256xf32, #tpu.memory_space<vmem>>, vector<32x256xf32>
    %cst_41 = arith.constant dense<0.000000e+00> : vector<8x256xf32>
    %97 = tpu.matmul %95, %96, %cst_41 {dimension_numbers = #tpu.dot_dimension_numbers<[1], [0], [0], [1], [0, 0, 1, 1], [], []>} : vector<8x32xf32>, vector<32x256xf32>, vector<8x256xf32> -> vector<8x256xf32>
    %98 = vector.extract_strided_slice %97 {offsets = [0, 0], sizes = [8, 128], strides = [1, 1]} : vector<8x256xf32> to vector<8x128xf32>
    %99 = vector.extract_strided_slice %97 {offsets = [0, 128], sizes = [8, 128], strides = [1, 1]} : vector<8x256xf32> to vector<8x128xf32>
    %100 = arith.negf %98 : vector<8x128xf32>
    %101 = math.exp %100 : vector<8x128xf32>
    %cst_42 = arith.constant 1.000000e+00 : f32
    %102 = vector.broadcast %cst_42 : f32 to vector<8x128xf32>
    %103 = arith.addf %102, %101 : vector<8x128xf32>
    %104 = arith.divf %102, %103 : vector<8x128xf32>
    %105 = arith.mulf %98, %104 : vector<8x128xf32>
    %106 = arith.mulf %105, %99 : vector<8x128xf32>
    %c0_43 = arith.constant 0 : index
    %c0_44 = arith.constant 0 : index
    %107 = vector.load %arg8[%c0_43, %c0_44] : memref<128x32xf32, #tpu.memory_space<vmem>>, vector<128x32xf32>
    %cst_45 = arith.constant dense<0.000000e+00> : vector<8x32xf32>
    %108 = tpu.matmul %106, %107, %cst_45 {dimension_numbers = #tpu.dot_dimension_numbers<[1], [0], [0], [1], [0, 0, 1, 1], [], []>} : vector<8x128xf32>, vector<128x32xf32>, vector<8x32xf32> -> vector<8x32xf32>
    %109 = arith.addf %82, %108 : vector<8x32xf32>
    %c0_46 = arith.constant 0 : index
    %c0_47 = arith.constant 0 : index
    %c0_48 = arith.constant 0 : index
    %110 = vector.load %arg9[%c0_46, %c0_47, %c0_48] : memref<1x8x32xf32, #tpu.memory_space<vmem>>, vector<1x8x32xf32>
    %111 = vector.shape_cast %110 : vector<1x8x32xf32> to vector<8x32xf32>
    %112 = vector.shape_cast %109 : vector<8x32xf32> to vector<1x8x32xf32>
    tpu.vector_store %arg9[%c0_46, %c0_47, %c0_48], %112 {strides = array<i32>} : memref<1x8x32xf32, #tpu.memory_space<vmem>>, vector<1x8x32xf32>,
    return
  }
  func.func @transform_0(%arg0: i32, %arg1: i32) -> (i32, i32, i32) {
    %c0_i32 = arith.constant 0 : i32
    %c0_i32_0 = arith.constant 0 : i32
    %c0_i32_1 = arith.constant 0 : i32
    return %arg0, %c0_i32, %c0_i32_0 : i32, i32, i32
  }
  func.func @transform_1(%arg0: i32, %arg1: i32) -> (i32, i32) {
    %c0_i32 = arith.constant 0 : i32
    %c0_i32_0 = arith.constant 0 : i32
    %c0_i32_1 = arith.constant 0 : i32
    return %c0_i32, %c0_i32_0 : i32, i32
  }
  func.func @transform_2(%arg0: i32, %arg1: i32) -> (i32, i32) {
    %c0_i32 = arith.constant 0 : i32
    %c0_i32_0 = arith.constant 0 : i32
    %c0_i32_1 = arith.constant 0 : i32
    return %c0_i32, %c0_i32_0 : i32, i32
  }
  func.func @transform_3(%arg0: i32, %arg1: i32) -> (i32, i32) {
    %c0_i32 = arith.constant 0 : i32
    %c0_i32_0 = arith.constant 0 : i32
    %c0_i32_1 = arith.constant 0 : i32
    return %c0_i32, %c0_i32_0 : i32, i32
  }
  func.func @transform_4(%arg0: i32, %arg1: i32) -> (i32, i32) {
    %c0_i32 = arith.constant 0 : i32
    %c0_i32_0 = arith.constant 0 : i32
    %c0_i32_1 = arith.constant 0 : i32
    return %c0_i32, %c0_i32_0 : i32, i32
  }
  func.func @transform_5(%arg0: i32, %arg1: i32) -> (i32, i32) {
    %c0_i32 = arith.constant 0 : i32
    %c0_i32_0 = arith.constant 0 : i32
    %c0_i32_1 = arith.constant 0 : i32
    return %c0_i32, %c0_i32_0 : i32, i32
  }
  func.func @transform_6(%arg0: i32, %arg1: i32) -> (i32, i32) {
    %c0_i32 = arith.constant 0 : i32
    %c0_i32_0 = arith.constant 0 : i32
    %c0_i32_1 = arith.constant 0 : i32
    return %c0_i32, %c0_i32_0 : i32, i32
  }
  func.func @transform_7(%arg0: i32, %arg1: i32) -> (i32, i32, i32) {
    %c0_i32 = arith.constant 0 : i32
    %c0_i32_0 = arith.constant 0 : i32
    return %arg0, %arg1, %c0_i32 : i32, i32, i32
  }
}

</mosaic_0001>

<llo_original>
// kernel: tpu_custom_call.1
$region0: #{tpu_custom_call.1}
  #allocation0 [shape = 'u32[]', space=smem, size = 0x4, offset = 0x4, fixed_abs, tag = 'smem constant byte address 0x4 - core index']
  #allocation1 [shape = 'u32[144,128]{1,0:T(1,128)}', space=vmem, size = 0x12000, scoped, tag = 'internal scratch']
  #allocation2 [shape = 'f32[8,32]{1,0:T(8,128)}', space=vmem, size = 0x1000, scoped, tag = 'scratch operand']
  #allocation3 [shape = 'f32[8,64]{1,0:T(8,128)}', space=vmem, size = 0x1000, scoped, tag = 'scratch operand']
  #allocation4 [shape = 'f32[8,32]{1,0:T(8,128)}', space=vmem, size = 0x1000, scoped, tag = 'scratch operand']
  %s0 = inlined_call_operand.vmem [shape: f32[2,8,32], index: 0, kind: input, shape index: {}]
  %s1 = inlined_call_operand.vmem [shape: f32[1,32], index: 1, kind: input, shape index: {}]
  %s2 = inlined_call_operand.vmem [shape: f32[32,96], index: 2, kind: input, shape index: {}]
  %s3 = inlined_call_operand.vmem [shape: f32[32,32], index: 3, kind: input, shape index: {}]
  %s4 = inlined_call_operand.vmem [shape: f32[1,32], index: 4, kind: input, shape index: {}]
  %s5 = inlined_call_operand.vmem [shape: f32[32,256], index: 5, kind: input, shape index: {}]
  %s6 = inlined_call_operand.vmem [shape: f32[128,32], index: 6, kind: input, shape index: {}]
  %s7 = inlined_call_operand.hbm [shape: f32[2,8,32], index: 7, kind: output, shape index: {}]
  %s8 = sld [smem:[#allocation0]]
  $region65: #{tpu_custom_call.1} parent=0
    _
  %s10 = ssub.s32 1, %s8
  %s11 = scalar_select 0, %s10, %s8
  $region1: #{tpu_custom_call.1} parent=0
    #allocation5 [shape = 'u8[8192]{0}', space=vmem, size = 0x2000, scoped, tag = 'output window, operand 0']
    #allocation6 [shape = 's32[2]{0}', space=sflag, size = 0x8, scoped, tag = 'scoped memory for tpu_custom_call.1']
    %12 = vsyncpa [#allocation6], 0
    %s13 = scalar_lea.sflag [#allocation6], 1
    %14 = vsyncpa %s13, 0
    loop: start=0, step=1, limit=4
    $region2: #{tpu_custom_call.1} parent=1 // loop_pre_header
      _
    $region3: #{tpu_custom_call.1} parent=1 // loop_header
      %s16 = sphi 0, %s20
      %p17 = scmp.ge.s32.totalorder %s16, 4
      %s23 = sphi 0, %s35
      %s24 = sphi 0, %s31
      %s25 = sphi 0, %s23
      %s26 = sphi 0, %s24
      %s27 = sphi 0, %s25
      %s28 = sphi 0, %s26
      %s38 = sphi 0, %s40
      %s41 = sphi 0, %s38
      %s42 = sphi 0, %s41
      %s58 = sphi 0, %s42
      %s62 = sphi 0, %s62
      %s64 = sphi 0, %s62
      %s65 = sphi 0, %s64
      %s79 = sphi 0, %s65
      %s83 = sphi 0, %s83
      %s85 = sphi 0, %s83
      %s86 = sphi 0, %s85
      %s100 = sphi 0, %s86
      %s104 = sphi 0, %s104
      %s106 = sphi 0, %s104
      %s107 = sphi 0, %s106
      %s121 = sphi 0, %s107
      %s125 = sphi 0, %s125
      %s127 = sphi 0, %s125
      %s128 = sphi 0, %s127
      %s142 = sphi 0, %s128
      %s146 = sphi 0, %s146
      %s148 = sphi 0, %s146
      %s149 = sphi 0, %s148
      %s163 = sphi 0, %s149
      %s167 = sphi 0, %s167
      %s169 = sphi 0, %s167
      %s170 = sphi 0, %s169
      %s184 = sphi 0, %s170
      %s192 = sphi 0, %s194
      %s195 = sphi 0, %s192
      %s196 = sphi 0, %s195
      %s212 = sphi 0, %s196
    $region4: #{tpu_custom_call.1} parent=1 // loop_header_branch
      %19 = sbr.rel (%p17) target = $region8
    $region5: #{tpu_custom_call.1} parent=1 // loop_body
      %s21 = ssub.s32 %s16, 1
      %s22 = ssub.s32 %s16, 2
      %s29 = sadd.s32 1, %s24
      %p30 = scmp.ge.s32.totalorder %s29, 1
      %s31 = scalar_select %p30, 0, %s29
      %s32 = sadd.s32 1, %s23
      %s33 = scalar_select %p30, %s32, %s23
      %p34 = scmp.ge.s32.totalorder %s33, 2
      %s35 = scalar_select %p34, 0, %s33
      %s36 = ssub.s32 %s23, %s35
      %p37 = scmp.eq.s32.totalorder %s36, 0
      %s39 = sadd.s32 %s38, 1
      %s40 = scalar_select %p37, %s38, %s39
      %p43 = pneg %p37
      %p44 = scmp.eq.s32.totalorder %s16, 1
      %p45 = por %p43, %p44
      %p46 = scmp.ne.s32.totalorder %s38, %s41
      %p47 = scmp.eq.s32.totalorder %s16, 0
      %p48 = por %p46, %p47
      %p49 = scmp.ne.s32.totalorder %s38, %s41
      %p50 = scmp.eq.s32.totalorder %s21, 1
      %p51 = por %p49, %p50
      %p52 = scmp.ne.s32.totalorder %s41, %s42
      %p53 = scmp.eq.s32.totalorder %s21, 0
      %p54 = por %p52, %p53
      %p55 = scmp.ne.s32.totalorder %s41, %s42
      %p56 = scmp.eq.s32.totalorder %s22, 1
      %p57 = por %p55, %p56
      %p59 = scmp.ne.s32.totalorder %s42, %s58
      %p60 = scmp.eq.s32.totalorder %s22, 0
      %p61 = por %p59, %p60
      %s63 = sadd.s32 %s62, 1
      %p66 = scmp.eq.s32.totalorder %s16, 1
      %p67 = scmp.ne.s32.totalorder %s62, %s64
      %p68 = scmp.eq.s32.totalorder %s16, 0
      %p69 = por %p67, %p68
      %p70 = scmp.ne.s32.totalorder %s62, %s64
      %p71 = scmp.eq.s32.totalorder %s21, 1
      %p72 = por %p70, %p71
      %p73 = scmp.ne.s32.totalorder %s64, %s65
      %p74 = scmp.eq.s32.totalorder %s21, 0
      %p75 = por %p73, %p74
      %p76 = scmp.ne.s32.totalorder %s64, %s65
      %p77 = scmp.eq.s32.totalorder %s22, 1
      %p78 = por %p76, %p77
      %p80 = scmp.ne.s32.totalorder %s65, %s79
      %p81 = scmp.eq.s32.totalorder %s22, 0
      %p82 = por %p80, %p81
      %s84 = sadd.s32 %s83, 1
      %p87 = scmp.eq.s32.totalorder %s16, 1
      %p88 = scmp.ne.s32.totalorder %s83, %s85
      %p89 = scmp.eq.s32.totalorder %s16, 0
      %p90 = por %p88, %p89
      %p91 = scmp.ne.s32.totalorder %s83, %s85
      %p92 = scmp.eq.s32.totalorder %s21, 1
      %p93 = por %p91, %p92
      %p94 = scmp.ne.s32.totalorder %s85, %s86
      %p95 = scmp.eq.s32.totalorder %s21, 0
      %p96 = por %p94, %p95
      %p97 = scmp.ne.s32.totalorder %s85, %s86
      %p98 = scmp.eq.s32.totalorder %s22, 1
      %p99 = por %p97, %p98
      %p101 = scmp.ne.s32.totalorder %s86, %s100
      %p102 = scmp.eq.s32.totalorder %s22, 0
      %p103 = por %p101, %p102
      %s105 = sadd.s32 %s104, 1
      %p108 = scmp.eq.s32.totalorder %s16, 1
      %p109 = scmp.ne.s32.totalorder %s104, %s106
      %p110 = scmp.eq.s32.totalorder %s16, 0
      %p111 = por %p109, %p110
      %p112 = scmp.ne.s32.totalorder %s104, %s106
      %p113 = scmp.eq.s32.totalorder %s21, 1
      %p114 = por %p112, %p113
      %p115 = scmp.ne.s32.totalorder %s106, %s107
      %p116 = scmp.eq.s32.totalorder %s21, 0
      %p117 = por %p115, %p116
      %p118 = scmp.ne.s32.totalorder %s106, %s107
      %p119 = scmp.eq.s32.totalorder %s22, 1
      %p120 = por %p118, %p119
      %p122 = scmp.ne.s32.totalorder %s107, %s121
      %p123 = scmp.eq.s32.totalorder %s22, 0
      %p124 = por %p122, %p123
      %s126 = sadd.s32 %s125, 1
      %p129 = scmp.eq.s32.totalorder %s16, 1
      %p130 = scmp.ne.s32.totalorder %s125, %s127
      %p131 = scmp.eq.s32.totalorder %s16, 0
      %p132 = por %p130, %p131
      %p133 = scmp.ne.s32.totalorder %s125, %s127
      %p134 = scmp.eq.s32.totalorder %s21, 1
      %p135 = por %p133, %p134
      %p136 = scmp.ne.s32.totalorder %s127, %s128
      %p137 = scmp.eq.s32.totalorder %s21, 0
      %p138 = por %p136, %p137
      %p139 = scmp.ne.s32.totalorder %s127, %s128
      %p140 = scmp.eq.s32.totalorder %s22, 1
      %p141 = por %p139, %p140
      %p143 = scmp.ne.s32.totalorder %s128, %s142
      %p144 = scmp.eq.s32.totalorder %s22, 0
      %p145 = por %p143, %p144
      %s147 = sadd.s32 %s146, 1
      %p150 = scmp.eq.s32.totalorder %s16, 1
      %p151 = scmp.ne.s32.totalorder %s146, %s148
      %p152 = scmp.eq.s32.totalorder %s16, 0
      %p153 = por %p151, %p152
      %p154 = scmp.ne.s32.totalorder %s146, %s148
      %p155 = scmp.eq.s32.totalorder %s21, 1
      %p156 = por %p154, %p155
      %p157 = scmp.ne.s32.totalorder %s148, %s149
      %p158 = scmp.eq.s32.totalorder %s21, 0
      %p159 = por %p157, %p158
      %p160 = scmp.ne.s32.totalorder %s148, %s149
      %p161 = scmp.eq.s32.totalorder %s22, 1
      %p162 = por %p160, %p161
      %p164 = scmp.ne.s32.totalorder %s149, %s163
      %p165 = scmp.eq.s32.totalorder %s22, 0
      %p166 = por %p164, %p165
      %s168 = sadd.s32 %s167, 1
      %p171 = scmp.eq.s32.totalorder %s16, 1
      %p172 = scmp.ne.s32.totalorder %s167, %s169
      %p173 = scmp.eq.s32.totalorder %s16, 0
      %p174 = por %p172, %p173
      %p175 = scmp.ne.s32.totalorder %s167, %s169
      %p176 = scmp.eq.s32.totalorder %s21, 1
      %p177 = por %p175, %p176
      %p178 = scmp.ne.s32.totalorder %s169, %s170
      %p179 = scmp.eq.s32.totalorder %s21, 0
      %p180 = por %p178, %p179
      %p181 = scmp.ne.s32.totalorder %s169, %s170
      %p182 = scmp.eq.s32.totalorder %s22, 1
      %p183 = por %p181, %p182
      %p185 = scmp.ne.s32.totalorder %s170, %s184
      %p186 = scmp.eq.s32.totalorder %s22, 0
      %p187 = por %p185, %p186
      %s188 = ssub.s32 %s23, %s35
      %s189 = ssub.s32 %s24, %s31
      %s190 = sor.u32 %s188, %s189
      %p191 = scmp.eq.s32.totalorder %s190, 0
      %s193 = sadd.s32 %s192, 1
      %s194 = scalar_select %p191, %s192, %s193
      %p197 = pneg %p191
      %p198 = scmp.eq.s32.totalorder %s16, 1
      %p199 = por %p197, %p198
      %p200 = scmp.ne.s32.totalorder %s192, %s195
      %p201 = scmp.eq.s32.totalorder %s16, 0
      %p202 = por %p200, %p201
      %p203 = scmp.ne.s32.totalorder %s192, %s195
      %p204 = scmp.eq.s32.totalorder %s21, 1
      %p205 = por %p203, %p204
      %p206 = scmp.ne.s32.totalorder %s195, %s196
      %p207 = scmp.eq.s32.totalorder %s21, 0
      %p208 = por %p206, %p207
      %p209 = scmp.ne.s32.totalorder %s195, %s196
      %p210 = scmp.eq.s32.totalorder %s22, 1
      %p211 = por %p209, %p210
      %p213 = scmp.ne.s32.totalorder %s196, %s212
      %p214 = scmp.eq.s32.totalorder %s22, 0
      %p215 = por %p213, %p214
      %p216 = scmp.le.s32.totalorder 1, %s16
      %p217 = scmp.lt.s32.totalorder %s16, 3
      %p218 = pnand %p216, %p217
      %p219 = pneg %p218
      // Predicated region
      $region9: #{tpu_custom_call.1} parent=5 // pred_check
        _
      $region10: #{tpu_custom_call.1} parent=5 // pred_check_branch
        %221 = sbr.rel (%p218) target = $region12
      $region11: #{tpu_custom_call.1} parent=5 // pred_region
        %s222 = ssub.s32 %s16, 1
        // Predicated region
        $region13: #{tpu_custom_call.1} parent=11 // pred_check
          %p223 = pneg %p75
        $region14: #{tpu_custom_call.1} parent=11 // pred_check_branch
          %225 = sbr.rel (%p223) target = $region16
        $region15: #{tpu_custom_call.1} parent=11 // pred_region
          _
        $region16: #{tpu_custom_call.1} parent=11 // pred_fallthru
          _
        // Predicated region
        $region17: #{tpu_custom_call.1} parent=11 // pred_check
          %p226 = pneg %p96
        $region18: #{tpu_custom_call.1} parent=11 // pred_check_branch
          %228 = sbr.rel (%p226) target = $region20
        $region19: #{tpu_custom_call.1} parent=11 // pred_region
          _
        $region20: #{tpu_custom_call.1} parent=11 // pred_fallthru
          _
        // Predicated region
        $region21: #{tpu_custom_call.1} parent=11 // pred_check
          %p229 = pneg %p117
        $region22: #{tpu_custom_call.1} parent=11 // pred_check_branch
          %231 = sbr.rel (%p229) target = $region24
        $region23: #{tpu_custom_call.1} parent=11 // pred_region
          _
        $region24: #{tpu_custom_call.1} parent=11 // pred_fallthru
          _
        // Predicated region
        $region25: #{tpu_custom_call.1} parent=11 // pred_check
          %p232 = pneg %p138
        $region26: #{tpu_custom_call.1} parent=11 // pred_check_branch
          %234 = sbr.rel (%p232) target = $region28
        $region27: #{tpu_custom_call.1} parent=11 // pred_region
          _
        $region28: #{tpu_custom_call.1} parent=11 // pred_fallthru
          _
        // Predicated region
        $region29: #{tpu_custom_call.1} parent=11 // pred_check
          %p235 = pneg %p159
        $region30: #{tpu_custom_call.1} parent=11 // pred_check_branch
          %237 = sbr.rel (%p235) target = $region32
        $region31: #{tpu_custom_call.1} parent=11 // pred_region
          _
        $region32: #{tpu_custom_call.1} parent=11 // pred_fallthru
          _
        // Predicated region
        $region33: #{tpu_custom_call.1} parent=11 // pred_check
          %p238 = pneg %p180
        $region34: #{tpu_custom_call.1} parent=11 // pred_check_branch
          %240 = sbr.rel (%p238) target = $region36
        $region35: #{tpu_custom_call.1} parent=11 // pred_region
          _
        $region36: #{tpu_custom_call.1} parent=11 // pred_fallthru
          _
      $region12: #{tpu_custom_call.1} parent=5 // pred_fallthru
        _
      %p241 = scmp.lt.s32.totalorder %s16, 2
      // Predicated region
      $region37: #{tpu_custom_call.1} parent=5 // pred_check
        %p242 = pneg %p241
      $region38: #{tpu_custom_call.1} parent=5 // pred_check_branch
        %244 = sbr.rel (%p242) target = $region40
      $region39: #{tpu_custom_call.1} parent=5 // pred_region
        // Predicated region
        $region41: #{tpu_custom_call.1} parent=39 // pred_check
          %p245 = pneg %p48
        $region42: #{tpu_custom_call.1} parent=39 // pred_check_branch
          %247 = sbr.rel (%p245) target = $region44
        $region43: #{tpu_custom_call.1} parent=39 // pred_region
          %p248 = scmp.lt.s32.totalorder %s23, 1
          %s249 = scalar_select %p248, %s23, 1
          %s250 = smul.addr %s249, 8
          %s251 = scalar_lea.vmem %s0, %s250
        $region44: #{tpu_custom_call.1} parent=39 // pred_fallthru
          _
      $region40: #{tpu_custom_call.1} parent=5 // pred_fallthru
        _
      %p252 = scmp.le.s32.totalorder 1, %s16
      %p253 = scmp.lt.s32.totalorder %s16, 3
      %p254 = pnand %p252, %p253
      %p255 = pneg %p254
      // Predicated region
      $region45: #{tpu_custom_call.1} parent=5 // pred_check
        _
      $region46: #{tpu_custom_call.1} parent=5 // pred_check_branch
        %257 = sbr.rel (%p254) target = $region48
      $region47: #{tpu_custom_call.1} parent=5 // pred_region
        %s258 = ssub.s32 %s16, 1
        %p259 = scmp.lt.s32.totalorder %s25, 1
        %s260 = scalar_select %p259, %s25, 1
        %s261 = smul.addr %s260, 8
        %s262 = scalar_lea.vmem %s0, %s261
        %p263 = pneg %p54
        %p264 = pneg %p51
        %p265 = pneg %p75
        %p266 = pneg %p72
        %p267 = pneg %p96
        %p268 = pneg %p93
        %p269 = pneg %p117
        %p270 = pneg %p114
        %p271 = pneg %p138
        %p272 = pneg %p135
        %p273 = pneg %p159
        %p274 = pneg %p156
        %p275 = pneg %p180
        %p276 = pneg %p177
        %p277 = pneg %p208
        %p278 = pneg %p205
        %s279 = sand.u32 %s195, 1
        %s280 = scalar_lea.sflag [#allocation6], %s279
        %s281 = sand.u32 %s195, 1
        %s282 = smul.addr %s281, 8
        %s283 = scalar_lea.vmem [#allocation5], %s282
        %p284 = scmp.lt.s32.totalorder %s25, 1
        %s285 = scalar_select %p284, %s25, 1
        %s286 = smul.addr %s285, 8
        %s287 = scalar_lea.vmem %s0, %s286
        %p288 = scmp.eq.s32.totalorder %s26, 0
        // Predicated region
        $region49: #{tpu_custom_call.1} parent=47 // pred_check
          %p289 = pneg %p288
        $region50: #{tpu_custom_call.1} parent=47 // pred_check_branch
          %291 = sbr.rel (%p289) target = $region52
        $region51: #{tpu_custom_call.1} parent=47 // pred_region
          %v292 = vld [vmem:[%s287] sm:$0xff]
          %v293 = vmul.f32 %v292, %v292
          %vm294 = vcmask 261120
          %v295 = vsel %vm294, %v293, 0.0
          %296 = vadd.xlane.f32.xlu0 %v295
          %v297 = vpop.xlane.xlu0 %296
          %v298 = vrcp.pop 32.0
          %v299 = vmul.f32 %v297, %v298
          %v300 = vadd.f32 %v299, 1e-06
          %v301 = vrsqrt.pop %v300
          %v302 = vmul.f32 %v292, %v301
          %v303 = vld [vmem:[%s1] sm:$0x1]
          %v305 = vlaneseq
          %v306 = vshrl.u32 %v305, 7
          %v307 = vsub.s32 0, %v306
          %v308 = vrot.slane %v303, %v307
          %v310 = vmul.f32 %v302, %v308
          %v311 = vld [vmem:[%s2] sm:$0xff]
          %v312 = vld [vmem:[%s2 + $0x8] sm:$0xff]
          %v313 = vld [vmem:[%s2 + $0x10] sm:$0xff]
          %v314 = vld [vmem:[%s2 + $0x18] sm:$0xff]
          %v316 = vsel %vm294, %v310, 0
          %318 = vmatprep.subr.mxu0 0.0
          %319 = vmatpush1.msra.mxu0 0.0
          %320 = vmatprep.subr.mxu0 0.0
          %321 = vmatpush1.msra.mxu0 0.0
          %322 = vmatprep.subr.mxu0 0.0
          %323 = vmatpush1.msra.mxu0 0.0
          %324 = vmatprep.subr.mxu0 0.0
          %325 = vmatpush1.msra.mxu0 0.0
          %326 = vmatprep.subr.mxu0 0.0
          %327 = vmatpush1.msra.mxu0 0.0
          %328 = vmatprep.subr.mxu0 0.0
          %329 = vmatpush1.msra.mxu0 0.0
          %330 = vmatprep.subr.mxu0 0.0
          %331 = vmatpush1.msra.mxu0 0.0
          %332 = vmatprep.subr.mxu0 0.0
          %333 = vmatpush1.msra.mxu0 0.0
          %334 = vmatprep.subr.mxu0 0.0
          %335 = vmatpush1.msra.mxu0 0.0
          %336 = vmatprep.subr.mxu0 0.0
          %337 = vmatpush1.msra.mxu0 0.0
          %338 = vmatprep.subr.mxu0 0.0
          %339 = vmatpush1.msra.mxu0 0.0
          %340 = vmatprep.subr.mxu0 0.0
          %341 = vmatpush1.msra.mxu0 0.0
          %342 = vmatprep.subr.mxu0 0.0
          %343 = vmatpush1.msra.mxu0 %v314
          %344 = vmatprep.subr.mxu0 0.0
          %345 = vmatpush1.msra.mxu0 %v313
          %346 = vmatprep.subr.mxu0 0.0
          %347 = vmatpush1.msra.mxu0 %v312
          %348 = vmatprep.subr.mxu0 0.0
          %349 = vmatpush1.msra.mxu0 %v311
          %350 = vmatprep.subr.mxu0 0.0
          %351 = vmatpush2.msra.mxu0 0.0
          %352 = vmatprep.subr.mxu0 0.0
          %353 = vmatpush2.msra.mxu0 0.0
          %354 = vmatprep.subr.mxu0 0.0
          %355 = vmatpush2.msra.mxu0 0.0
          %356 = vmatprep.subr.mxu0 0.0
          %357 = vmatpush2.msra.mxu0 0.0
          %358 = vmatprep.subr.mxu0 0.0
          %359 = vmatpush2.msra.mxu0 0.0
          %360 = vmatprep.subr.mxu0 0.0
          %361 = vmatpush2.msra.mxu0 0.0
          %362 = vmatprep.subr.mxu0 0.0
          %363 = vmatpush2.msra.mxu0 0.0
          %364 = vmatprep.subr.mxu0 0.0
          %365 = vmatpush2.msra.mxu0 0.0
          %366 = vmatprep.subr.mxu0 0.0
          %367 = vmatpush2.msra.mxu0 0.0
          %368 = vmatprep.subr.mxu0 0.0
          %369 = vmatpush2.msra.mxu0 0.0
          %370 = vmatprep.subr.mxu0 0.0
          %371 = vmatpush2.msra.mxu0 0.0
          %372 = vmatprep.subr.mxu0 0.0
          %373 = vmatpush2.msra.mxu0 0.0
          %374 = vmatprep.subr.mxu0 0.0
          %375 = vmatpush2.msra.mxu0 0.0
          %376 = vmatprep.subr.mxu0 0.0
          %377 = vmatpush2.msra.mxu0 0.0
          %378 = vmatprep.subr.mxu0 0.0
          %379 = vmatpush2.msra.mxu0 0.0
          %380 = vmatprep.subr.mxu0 0.0
          %381 = vmatpush2.msra.mxu0 0.0
          %382 = vmatprep.mubr.f32.mxu0 0.0
          %383 = vmatmul.mubr.f32.gmra.mxu0 %v316
          %v384 = vpop.f32.mrf.mxu0
          %v385 = vadd.f32 0.0, %v384
          %v386 = vpop.f32.mrf.mxu0
          %387 = vdwg.mxu0
          %388 = vst.msk [vmem:[#allocation2] sm:$0xff] %vm294, %v385
          %390 = vrot.lane.b32.xlu0 %v385, 96
          %v391 = vpop.permute.xlu0 %390
          %vm393 = vcmask 523264
          %394 = vst.msk [vmem:[#allocation3] sm:$0xff] %vm393, %v391
        $region52: #{tpu_custom_call.1} parent=47 // pred_fallthru
          _
        %s395 = smul.u32 %s26, 8
        %s396 = scalar_lea.vmem %s287, %s395
        %v397 = vld [vmem:[%s396] sm:$0xff]
        %s398 = scalar_lea.vmem [#allocation2], %s395
        %v399 = vld [vmem:[%s398] sm:$0xff]
        %v400 = vld [vmem:[#allocation3] sm:$0xff]
        %vm401 = vcmask 64512
        %v403 = vsel %vm401, %v399, 0
        %v406 = vsel %vm401, %v400, 0
        %408 = vmatprep.subr.mxu0 0.0
        %409 = vmatpush1.xpose.msra.mxu0 0.0
        %410 = vmatprep.subr.mxu0 0.0
        %411 = vmatpush1.xpose.msra.mxu0 0.0
        %412 = vmatprep.subr.mxu0 0.0
        %413 = vmatpush1.xpose.msra.mxu0 0.0
        %414 = vmatprep.subr.mxu0 0.0
        %415 = vmatpush1.xpose.msra.mxu0 0.0
        %416 = vmatprep.subr.mxu0 0.0
        %417 = vmatpush1.xpose.msra.mxu0 0.0
        %418 = vmatprep.subr.mxu0 0.0
        %419 = vmatpush1.xpose.msra.mxu0 0.0
        %420 = vmatprep.subr.mxu0 0.0
        %421 = vmatpush1.xpose.msra.mxu0 0.0
        %422 = vmatprep.subr.mxu0 0.0
        %423 = vmatpush1.xpose.msra.mxu0 0.0
        %424 = vmatprep.subr.mxu0 0.0
        %425 = vmatpush1.xpose.msra.mxu0 0.0
        %426 = vmatprep.subr.mxu0 0.0
        %427 = vmatpush1.xpose.msra.mxu0 0.0
        %428 = vmatprep.subr.mxu0 0.0
        %429 = vmatpush1.xpose.msra.mxu0 0.0
        %430 = vmatprep.subr.mxu0 0.0
        %431 = vmatpush1.xpose.msra.mxu0 0.0
        %432 = vmatprep.subr.mxu0 0.0
        %433 = vmatpush1.xpose.msra.mxu0 0.0
        %434 = vmatprep.subr.mxu0 0.0
        %435 = vmatpush1.xpose.msra.mxu0 0.0
        %436 = vmatprep.subr.mxu0 0.0
        %437 = vmatpush1.xpose.msra.mxu0 0.0
        %438 = vmatprep.subr.mxu0 0.0
        %439 = vmatpush1.xpose.msra.mxu0 %v406
        %440 = vmatprep.subr.mxu0 0.0
        %441 = vmatpush2.xpose.msra.mxu0 0.0
        %442 = vmatprep.subr.mxu0 0.0
        %443 = vmatpush2.xpose.msra.mxu0 0.0
        %444 = vmatprep.subr.mxu0 0.0
        %445 = vmatpush2.xpose.msra.mxu0 0.0
        %446 = vmatprep.subr.mxu0 0.0
        %447 = vmatpush2.xpose.msra.mxu0 0.0
        %448 = vmatprep.subr.mxu0 0.0
        %449 = vmatpush2.xpose.msra.mxu0 0.0
        %450 = vmatprep.subr.mxu0 0.0
        %451 = vmatpush2.xpose.msra.mxu0 0.0
        %452 = vmatprep.subr.mxu0 0.0
        %453 = vmatpush2.xpose.msra.mxu0 0.0
        %454 = vmatprep.subr.mxu0 0.0
        %455 = vmatpush2.xpose.msra.mxu0 0.0
        %456 = vmatprep.subr.mxu0 0.0
        %457 = vmatpush2.xpose.msra.mxu0 0.0
        %458 = vmatprep.subr.mxu0 0.0
        %459 = vmatpush2.xpose.msra.mxu0 0.0
        %460 = vmatprep.subr.mxu0 0.0
        %461 = vmatpush2.xpose.msra.mxu0 0.0
        %462 = vmatprep.subr.mxu0 0.0
        %463 = vmatpush2.xpose.msra.mxu0 0.0
        %464 = vmatprep.subr.mxu0 0.0
        %465 = vmatpush2.xpose.msra.mxu0 0.0
        %466 = vmatprep.subr.mxu0 0.0
        %467 = vmatpush2.xpose.msra.mxu0 0.0
        %468 = vmatprep.subr.mxu0 0.0
        %469 = vmatpush2.xpose.msra.mxu0 0.0
        %470 = vmatprep.subr.mxu0 0.0
        %471 = vmatpush2.xpose.msra.mxu0 0.0
        %472 = vmatprep.mubr.f32.mxu0 0.0
        %473 = vmatmul.mubr.f32.gmra.mxu0 %v403
        %v474 = vpop.f32.mrf.mxu0
        %v475 = vadd.f32 0.0, %v474
        %v476 = vpop.f32.mrf.mxu0
        %477 = vdwg.mxu0
        %v478 = vmul.f32 %v475, 0.35355338
        %v479 = vsel %vm401, %v478, -inf
        %480 = vmax.xlane.f32.xlu0 %v479
        %v481 = vpop.xlane.xlu0 %480
        %v482 = vsub.f32 %v478, %v481
        %v483 = vmul.f32 %v482, 1.442695
        %v484 = vpow.pop %v483
        %v485 = vsel %vm401, %v484, 0.0
        %486 = vadd.xlane.f32.xlu0 %v485
        %v487 = vpop.xlane.xlu0 %486
        %488 = vrot.lane.b32.xlu0 %v400, 96
        %v489 = vpop.permute.xlu0 %488
        %v492 = vsel %vm401, %v484, 0
        %494 = vmatprep.subr.mxu0 0.0
        %495 = vmatpush1.msra.mxu0 0.0
        %496 = vmatprep.subr.mxu0 0.0
        %497 = vmatpush1.msra.mxu0 0.0
        %498 = vmatprep.subr.mxu0 0.0
        %499 = vmatpush1.msra.mxu0 0.0
        %500 = vmatprep.subr.mxu0 0.0
        %501 = vmatpush1.msra.mxu0 0.0
        %502 = vmatprep.subr.mxu0 0.0
        %503 = vmatpush1.msra.mxu0 0.0
        %504 = vmatprep.subr.mxu0 0.0
        %505 = vmatpush1.msra.mxu0 0.0
        %506 = vmatprep.subr.mxu0 0.0
        %507 = vmatpush1.msra.mxu0 0.0
        %508 = vmatprep.subr.mxu0 0.0
        %509 = vmatpush1.msra.mxu0 0.0
        %510 = vmatprep.subr.mxu0 0.0
        %511 = vmatpush1.msra.mxu0 0.0
        %512 = vmatprep.subr.mxu0 0.0
        %513 = vmatpush1.msra.mxu0 0.0
        %514 = vmatprep.subr.mxu0 0.0
        %515 = vmatpush1.msra.mxu0 0.0
        %516 = vmatprep.subr.mxu0 0.0
        %517 = vmatpush1.msra.mxu0 0.0
        %518 = vmatprep.subr.mxu0 0.0
        %519 = vmatpush1.msra.mxu0 0.0
        %520 = vmatprep.subr.mxu0 0.0
        %521 = vmatpush1.msra.mxu0 0.0
        %522 = vmatprep.subr.mxu0 0.0
        %523 = vmatpush1.msra.mxu0 0.0
        %524 = vmatprep.subr.mxu0 0.0
        %525 = vmatpush1.msra.mxu0 %v489
        %526 = vmatprep.subr.mxu0 0.0
        %527 = vmatpush2.msra.mxu0 0.0
        %528 = vmatprep.subr.mxu0 0.0
        %529 = vmatpush2.msra.mxu0 0.0
        %530 = vmatprep.subr.mxu0 0.0
        %531 = vmatpush2.msra.mxu0 0.0
        %532 = vmatprep.subr.mxu0 0.0
        %533 = vmatpush2.msra.mxu0 0.0
        %534 = vmatprep.subr.mxu0 0.0
        %535 = vmatpush2.msra.mxu0 0.0
        %536 = vmatprep.subr.mxu0 0.0
        %537 = vmatpush2.msra.mxu0 0.0
        %538 = vmatprep.subr.mxu0 0.0
        %539 = vmatpush2.msra.mxu0 0.0
        %540 = vmatprep.subr.mxu0 0.0
        %541 = vmatpush2.msra.mxu0 0.0
        %542 = vmatprep.subr.mxu0 0.0
        %543 = vmatpush2.msra.mxu0 0.0
        %544 = vmatprep.subr.mxu0 0.0
        %545 = vmatpush2.msra.mxu0 0.0
        %546 = vmatprep.subr.mxu0 0.0
        %547 = vmatpush2.msra.mxu0 0.0
        %548 = vmatprep.subr.mxu0 0.0
        %549 = vmatpush2.msra.mxu0 0.0
        %550 = vmatprep.subr.mxu0 0.0
        %551 = vmatpush2.msra.mxu0 0.0
        %552 = vmatprep.subr.mxu0 0.0
        %553 = vmatpush2.msra.mxu0 0.0
        %554 = vmatprep.subr.mxu0 0.0
        %555 = vmatpush2.msra.mxu0 0.0
        %556 = vmatprep.subr.mxu0 0.0
        %557 = vmatpush2.msra.mxu0 0.0
        %558 = vmatprep.mubr.f32.mxu0 0.0
        %559 = vmatmul.mubr.f32.gmra.mxu0 %v492
        %v560 = vpop.f32.mrf.mxu0
        %v561 = vadd.f32 0.0, %v560
        %v562 = vpop.f32.mrf.mxu0
        %563 = vdwg.mxu0
        %v564 = vrcp.pop %v487
        %v565 = vmul.f32 %v561, %v564
        %566 = vst.msk [vmem:[#allocation4] sm:$0xff] %vm401, %v565
        %567 = vrot.lane.b32.xlu0 %v399, 120
        %v568 = vpop.permute.xlu0 %567
        %569 = vrot.lane.b32.xlu0 %v400, 120
        %v570 = vpop.permute.xlu0 %569
        %v571 = vsel %vm401, %v568, 0
        %v573 = vsel %vm401, %v570, 0
        %575 = vmatprep.subr.mxu0 0.0
        %576 = vmatpush1.xpose.msra.mxu0 0.0
        %577 = vmatprep.subr.mxu0 0.0
        %578 = vmatpush1.xpose.msra.mxu0 0.0
        %579 = vmatprep.subr.mxu0 0.0
        %580 = vmatpush1.xpose.msra.mxu0 0.0
        %581 = vmatprep.subr.mxu0 0.0
        %582 = vmatpush1.xpose.msra.mxu0 0.0
        %583 = vmatprep.subr.mxu0 0.0
        %584 = vmatpush1.xpose.msra.mxu0 0.0
        %585 = vmatprep.subr.mxu0 0.0
        %586 = vmatpush1.xpose.msra.mxu0 0.0
        %587 = vmatprep.subr.mxu0 0.0
        %588 = vmatpush1.xpose.msra.mxu0 0.0
        %589 = vmatprep.subr.mxu0 0.0
        %590 = vmatpush1.xpose.msra.mxu0 0.0
        %591 = vmatprep.subr.mxu0 0.0
        %592 = vmatpush1.xpose.msra.mxu0 0.0
        %593 = vmatprep.subr.mxu0 0.0
        %594 = vmatpush1.xpose.msra.mxu0 0.0
        %595 = vmatprep.subr.mxu0 0.0
        %596 = vmatpush1.xpose.msra.mxu0 0.0
        %597 = vmatprep.subr.mxu0 0.0
        %598 = vmatpush1.xpose.msra.mxu0 0.0
        %599 = vmatprep.subr.mxu0 0.0
        %600 = vmatpush1.xpose.msra.mxu0 0.0
        %601 = vmatprep.subr.mxu0 0.0
        %602 = vmatpush1.xpose.msra.mxu0 0.0
        %603 = vmatprep.subr.mxu0 0.0
        %604 = vmatpush1.xpose.msra.mxu0 0.0
        %605 = vmatprep.subr.mxu0 0.0
        %606 = vmatpush1.xpose.msra.mxu0 %v573
        %607 = vmatprep.subr.mxu0 0.0
        %608 = vmatpush2.xpose.msra.mxu0 0.0
        %609 = vmatprep.subr.mxu0 0.0
        %610 = vmatpush2.xpose.msra.mxu0 0.0
        %611 = vmatprep.subr.mxu0 0.0
        %612 = vmatpush2.xpose.msra.mxu0 0.0
        %613 = vmatprep.subr.mxu0 0.0
        %614 = vmatpush2.xpose.msra.mxu0 0.0
        %615 = vmatprep.subr.mxu0 0.0
        %616 = vmatpush2.xpose.msra.mxu0 0.0
        %617 = vmatprep.subr.mxu0 0.0
        %618 = vmatpush2.xpose.msra.mxu0 0.0
        %619 = vmatprep.subr.mxu0 0.0
        %620 = vmatpush2.xpose.msra.mxu0 0.0
        %621 = vmatprep.subr.mxu0 0.0
        %622 = vmatpush2.xpose.msra.mxu0 0.0
        %623 = vmatprep.subr.mxu0 0.0
        %624 = vmatpush2.xpose.msra.mxu0 0.0
        %625 = vmatprep.subr.mxu0 0.0
        %626 = vmatpush2.xpose.msra.mxu0 0.0
        %627 = vmatprep.subr.mxu0 0.0
        %628 = vmatpush2.xpose.msra.mxu0 0.0
        %629 = vmatprep.subr.mxu0 0.0
        %630 = vmatpush2.xpose.msra.mxu0 0.0
        %631 = vmatprep.subr.mxu0 0.0
        %632 = vmatpush2.xpose.msra.mxu0 0.0
        %633 = vmatprep.subr.mxu0 0.0
        %634 = vmatpush2.xpose.msra.mxu0 0.0
        %635 = vmatprep.subr.mxu0 0.0
        %636 = vmatpush2.xpose.msra.mxu0 0.0
        %637 = vmatprep.subr.mxu0 0.0
        %638 = vmatpush2.xpose.msra.mxu0 0.0
        %639 = vmatprep.mubr.f32.mxu0 0.0
        %640 = vmatmul.mubr.f32.gmra.mxu0 %v571
        %v641 = vpop.f32.mrf.mxu0
        %v642 = vadd.f32 0.0, %v641
        %v643 = vpop.f32.mrf.mxu0
        %644 = vdwg.mxu0
        %v645 = vmul.f32 %v642, 0.35355338
        %v646 = vsel %vm401, %v645, -inf
        %647 = vmax.xlane.f32.xlu0 %v646
        %v648 = vpop.xlane.xlu0 %647
        %v649 = vsub.f32 %v645, %v648
        %v650 = vmul.f32 %v649, 1.442695
        %v651 = vpow.pop %v650
        %v652 = vsel %vm401, %v651, 0.0
        %653 = vadd.xlane.f32.xlu0 %v652
        %v654 = vpop.xlane.xlu0 %653
        %655 = vrot.lane.b32.xlu0 %v400, 88
        %v656 = vpop.permute.xlu0 %655
        %v659 = vsel %vm401, %v651, 0
        %661 = vmatprep.subr.mxu0 0.0
        %662 = vmatpush1.msra.mxu0 0.0
        %663 = vmatprep.subr.mxu0 0.0
        %664 = vmatpush1.msra.mxu0 0.0
        %665 = vmatprep.subr.mxu0 0.0
        %666 = vmatpush1.msra.mxu0 0.0
        %667 = vmatprep.subr.mxu0 0.0
        %668 = vmatpush1.msra.mxu0 0.0
        %669 = vmatprep.subr.mxu0 0.0
        %670 = vmatpush1.msra.mxu0 0.0
        %671 = vmatprep.subr.mxu0 0.0
        %672 = vmatpush1.msra.mxu0 0.0
        %673 = vmatprep.subr.mxu0 0.0
        %674 = vmatpush1.msra.mxu0 0.0
        %675 = vmatprep.subr.mxu0 0.0
        %676 = vmatpush1.msra.mxu0 0.0
        %677 = vmatprep.subr.mxu0 0.0
        %678 = vmatpush1.msra.mxu0 0.0
        %679 = vmatprep.subr.mxu0 0.0
        %680 = vmatpush1.msra.mxu0 0.0
        %681 = vmatprep.subr.mxu0 0.0
        %682 = vmatpush1.msra.mxu0 0.0
        %683 = vmatprep.subr.mxu0 0.0
        %684 = vmatpush1.msra.mxu0 0.0
        %685 = vmatprep.subr.mxu0 0.0
        %686 = vmatpush1.msra.mxu0 0.0
        %687 = vmatprep.subr.mxu0 0.0
        %688 = vmatpush1.msra.mxu0 0.0
        %689 = vmatprep.subr.mxu0 0.0
        %690 = vmatpush1.msra.mxu0 0.0
        %691 = vmatprep.subr.mxu0 0.0
        %692 = vmatpush1.msra.mxu0 %v656
        %693 = vmatprep.subr.mxu0 0.0
        %694 = vmatpush2.msra.mxu0 0.0
        %695 = vmatprep.subr.mxu0 0.0
        %696 = vmatpush2.msra.mxu0 0.0
        %697 = vmatprep.subr.mxu0 0.0
        %698 = vmatpush2.msra.mxu0 0.0
        %699 = vmatprep.subr.mxu0 0.0
        %700 = vmatpush2.msra.mxu0 0.0
        %701 = vmatprep.subr.mxu0 0.0
        %702 = vmatpush2.msra.mxu0 0.0
        %703 = vmatprep.subr.mxu0 0.0
        %704 = vmatpush2.msra.mxu0 0.0
        %705 = vmatprep.subr.mxu0 0.0
        %706 = vmatpush2.msra.mxu0 0.0
        %707 = vmatprep.subr.mxu0 0.0
        %708 = vmatpush2.msra.mxu0 0.0
        %709 = vmatprep.subr.mxu0 0.0
        %710 = vmatpush2.msra.mxu0 0.0
        %711 = vmatprep.subr.mxu0 0.0
        %712 = vmatpush2.msra.mxu0 0.0
        %713 = vmatprep.subr.mxu0 0.0
        %714 = vmatpush2.msra.mxu0 0.0
        %715 = vmatprep.subr.mxu0 0.0
        %716 = vmatpush2.msra.mxu0 0.0
        %717 = vmatprep.subr.mxu0 0.0
        %718 = vmatpush2.msra.mxu0 0.0
        %719 = vmatprep.subr.mxu0 0.0
        %720 = vmatpush2.msra.mxu0 0.0
        %721 = vmatprep.subr.mxu0 0.0
        %722 = vmatpush2.msra.mxu0 0.0
        %723 = vmatprep.subr.mxu0 0.0
        %724 = vmatpush2.msra.mxu0 0.0
        %725 = vmatprep.mubr.f32.mxu0 0.0
        %726 = vmatmul.mubr.f32.gmra.mxu0 %v659
        %v727 = vpop.f32.mrf.mxu0
        %v728 = vadd.f32 0.0, %v727
        %v729 = vpop.f32.mrf.mxu0
        %730 = vdwg.mxu0
        %v731 = vrcp.pop %v654
        %v732 = vmul.f32 %v728, %v731
        %734 = vrot.lane.b32.xlu0 %v732, 8
        %v735 = vpop.permute.xlu0 %734
        %vm737 = vcmask 130112
        %738 = vst.msk [vmem:[#allocation4] sm:$0xff] %vm737, %v735
        %739 = vrot.lane.b32.xlu0 %v399, 112
        %v740 = vpop.permute.xlu0 %739
        %741 = vrot.lane.b32.xlu0 %v400, 112
        %v742 = vpop.permute.xlu0 %741
        %v743 = vsel %vm401, %v740, 0
        %v745 = vsel %vm401, %v742, 0
        %747 = vmatprep.subr.mxu0 0.0
        %748 = vmatpush1.xpose.msra.mxu0 0.0
        %749 = vmatprep.subr.mxu0 0.0
        %750 = vmatpush1.xpose.msra.mxu0 0.0
        %751 = vmatprep.subr.mxu0 0.0
        %752 = vmatpush1.xpose.msra.mxu0 0.0
        %753 = vmatprep.subr.mxu0 0.0
        %754 = vmatpush1.xpose.msra.mxu0 0.0
        %755 = vmatprep.subr.mxu0 0.0
        %756 = vmatpush1.xpose.msra.mxu0 0.0
        %757 = vmatprep.subr.mxu0 0.0
        %758 = vmatpush1.xpose.msra.mxu0 0.0
        %759 = vmatprep.subr.mxu0 0.0
        %760 = vmatpush1.xpose.msra.mxu0 0.0
        %761 = vmatprep.subr.mxu0 0.0
        %762 = vmatpush1.xpose.msra.mxu0 0.0
        %763 = vmatprep.subr.mxu0 0.0
        %764 = vmatpush1.xpose.msra.mxu0 0.0
        %765 = vmatprep.subr.mxu0 0.0
        %766 = vmatpush1.xpose.msra.mxu0 0.0
        %767 = vmatprep.subr.mxu0 0.0
        %768 = vmatpush1.xpose.msra.mxu0 0.0
        %769 = vmatprep.subr.mxu0 0.0
        %770 = vmatpush1.xpose.msra.mxu0 0.0
        %771 = vmatprep.subr.mxu0 0.0
        %772 = vmatpush1.xpose.msra.mxu0 0.0
        %773 = vmatprep.subr.mxu0 0.0
        %774 = vmatpush1.xpose.msra.mxu0 0.0
        %775 = vmatprep.subr.mxu0 0.0
        %776 = vmatpush1.xpose.msra.mxu0 0.0
        %777 = vmatprep.subr.mxu0 0.0
        %778 = vmatpush1.xpose.msra.mxu0 %v745
        %779 = vmatprep.subr.mxu0 0.0
        %780 = vmatpush2.xpose.msra.mxu0 0.0
        %781 = vmatprep.subr.mxu0 0.0
        %782 = vmatpush2.xpose.msra.mxu0 0.0
        %783 = vmatprep.subr.mxu0 0.0
        %784 = vmatpush2.xpose.msra.mxu0 0.0
        %785 = vmatprep.subr.mxu0 0.0
        %786 = vmatpush2.xpose.msra.mxu0 0.0
        %787 = vmatprep.subr.mxu0 0.0
        %788 = vmatpush2.xpose.msra.mxu0 0.0
        %789 = vmatprep.subr.mxu0 0.0
        %790 = vmatpush2.xpose.msra.mxu0 0.0
        %791 = vmatprep.subr.mxu0 0.0
        %792 = vmatpush2.xpose.msra.mxu0 0.0
        %793 = vmatprep.subr.mxu0 0.0
        %794 = vmatpush2.xpose.msra.mxu0 0.0
        %795 = vmatprep.subr.mxu0 0.0
        %796 = vmatpush2.xpose.msra.mxu0 0.0
        %797 = vmatprep.subr.mxu0 0.0
        %798 = vmatpush2.xpose.msra.mxu0 0.0
        %799 = vmatprep.subr.mxu0 0.0
        %800 = vmatpush2.xpose.msra.mxu0 0.0
        %801 = vmatprep.subr.mxu0 0.0
        %802 = vmatpush2.xpose.msra.mxu0 0.0
        %803 = vmatprep.subr.mxu0 0.0
        %804 = vmatpush2.xpose.msra.mxu0 0.0
        %805 = vmatprep.subr.mxu0 0.0
        %806 = vmatpush2.xpose.msra.mxu0 0.0
        %807 = vmatprep.subr.mxu0 0.0
        %808 = vmatpush2.xpose.msra.mxu0 0.0
        %809 = vmatprep.subr.mxu0 0.0
        %810 = vmatpush2.xpose.msra.mxu0 0.0
        %811 = vmatprep.mubr.f32.mxu0 0.0
        %812 = vmatmul.mubr.f32.gmra.mxu0 %v743
        %v813 = vpop.f32.mrf.mxu0
        %v814 = vadd.f32 0.0, %v813
        %v815 = vpop.f32.mrf.mxu0
        %816 = vdwg.mxu0
        %v817 = vmul.f32 %v814, 0.35355338
        %v818 = vsel %vm401, %v817, -inf
        %819 = vmax.xlane.f32.xlu0 %v818
        %v820 = vpop.xlane.xlu0 %819
        %v821 = vsub.f32 %v817, %v820
        %v822 = vmul.f32 %v821, 1.442695
        %v823 = vpow.pop %v822
        %v824 = vsel %vm401, %v823, 0.0
        %825 = vadd.xlane.f32.xlu0 %v824
        %v826 = vpop.xlane.xlu0 %825
        %827 = vrot.lane.b32.xlu0 %v400, 80
        %v828 = vpop.permute.xlu0 %827
        %v831 = vsel %vm401, %v823, 0
        %833 = vmatprep.subr.mxu0 0.0
        %834 = vmatpush1.msra.mxu0 0.0
        %835 = vmatprep.subr.mxu0 0.0
        %836 = vmatpush1.msra.mxu0 0.0
        %837 = vmatprep.subr.mxu0 0.0
        %838 = vmatpush1.msra.mxu0 0.0
        %839 = vmatprep.subr.mxu0 0.0
        %840 = vmatpush1.msra.mxu0 0.0
        %841 = vmatprep.subr.mxu0 0.0
        %842 = vmatpush1.msra.mxu0 0.0
        %843 = vmatprep.subr.mxu0 0.0
        %844 = vmatpush1.msra.mxu0 0.0
        %845 = vmatprep.subr.mxu0 0.0
        %846 = vmatpush1.msra.mxu0 0.0
        %847 = vmatprep.subr.mxu0 0.0
        %848 = vmatpush1.msra.mxu0 0.0
        %849 = vmatprep.subr.mxu0 0.0
        %850 = vmatpush1.msra.mxu0 0.0
        %851 = vmatprep.subr.mxu0 0.0
        %852 = vmatpush1.msra.mxu0 0.0
        %853 = vmatprep.subr.mxu0 0.0
        %854 = vmatpush1.msra.mxu0 0.0
        %855 = vmatprep.subr.mxu0 0.0
        %856 = vmatpush1.msra.mxu0 0.0
        %857 = vmatprep.subr.mxu0 0.0
        %858 = vmatpush1.msra.mxu0 0.0
        %859 = vmatprep.subr.mxu0 0.0
        %860 = vmatpush1.msra.mxu0 0.0
        %861 = vmatprep.subr.mxu0 0.0
        %862 = vmatpush1.msra.mxu0 0.0
        %863 = vmatprep.subr.mxu0 0.0
        %864 = vmatpush1.msra.mxu0 %v828
        %865 = vmatprep.subr.mxu0 0.0
        %866 = vmatpush2.msra.mxu0 0.0
        %867 = vmatprep.subr.mxu0 0.0
        %868 = vmatpush2.msra.mxu0 0.0
        %869 = vmatprep.subr.mxu0 0.0
        %870 = vmatpush2.msra.mxu0 0.0
        %871 = vmatprep.subr.mxu0 0.0
        %872 = vmatpush2.msra.mxu0 0.0
        %873 = vmatprep.subr.mxu0 0.0
        %874 = vmatpush2.msra.mxu0 0.0
        %875 = vmatprep.subr.mxu0 0.0
        %876 = vmatpush2.msra.mxu0 0.0
        %877 = vmatprep.subr.mxu0 0.0
        %878 = vmatpush2.msra.mxu0 0.0
        %879 = vmatprep.subr.mxu0 0.0
        %880 = vmatpush2.msra.mxu0 0.0
        %881 = vmatprep.subr.mxu0 0.0
        %882 = vmatpush2.msra.mxu0 0.0
        %883 = vmatprep.subr.mxu0 0.0
        %884 = vmatpush2.msra.mxu0 0.0
        %885 = vmatprep.subr.mxu0 0.0
        %886 = vmatpush2.msra.mxu0 0.0
        %887 = vmatprep.subr.mxu0 0.0
        %888 = vmatpush2.msra.mxu0 0.0
        %889 = vmatprep.subr.mxu0 0.0
        %890 = vmatpush2.msra.mxu0 0.0
        %891 = vmatprep.subr.mxu0 0.0
        %892 = vmatpush2.msra.mxu0 0.0
        %893 = vmatprep.subr.mxu0 0.0
        %894 = vmatpush2.msra.mxu0 0.0
        %895 = vmatprep.subr.mxu0 0.0
        %896 = vmatpush2.msra.mxu0 0.0
        %897 = vmatprep.mubr.f32.mxu0 0.0
        %898 = vmatmul.mubr.f32.gmra.mxu0 %v831
        %v899 = vpop.f32.mrf.mxu0
        %v900 = vadd.f32 0.0, %v899
        %v901 = vpop.f32.mrf.mxu0
        %902 = vdwg.mxu0
        %v903 = vrcp.pop %v826
        %v904 = vmul.f32 %v900, %v903
        %906 = vrot.lane.b32.xlu0 %v904, 16
        %v907 = vpop.permute.xlu0 %906
        %vm909 = vcmask 195712
        %910 = vst.msk [vmem:[#allocation4] sm:$0xff] %vm909, %v907
        %911 = vrot.lane.b32.xlu0 %v399, 104
        %v912 = vpop.permute.xlu0 %911
        %913 = vrot.lane.b32.xlu0 %v400, 104
        %v914 = vpop.permute.xlu0 %913
        %v915 = vsel %vm401, %v912, 0
        %v917 = vsel %vm401, %v914, 0
        %919 = vmatprep.subr.mxu0 0.0
        %920 = vmatpush1.xpose.msra.mxu0 0.0
        %921 = vmatprep.subr.mxu0 0.0
        %922 = vmatpush1.xpose.msra.mxu0 0.0
        %923 = vmatprep.subr.mxu0 0.0
        %924 = vmatpush1.xpose.msra.mxu0 0.0
        %925 = vmatprep.subr.mxu0 0.0
        %926 = vmatpush1.xpose.msra.mxu0 0.0
        %927 = vmatprep.subr.mxu0 0.0
        %928 = vmatpush1.xpose.msra.mxu0 0.0
        %929 = vmatprep.subr.mxu0 0.0
        %930 = vmatpush1.xpose.msra.mxu0 0.0
        %931 = vmatprep.subr.mxu0 0.0
        %932 = vmatpush1.xpose.msra.mxu0 0.0
        %933 = vmatprep.subr.mxu0 0.0
        %934 = vmatpush1.xpose.msra.mxu0 0.0
        %935 = vmatprep.subr.mxu0 0.0
        %936 = vmatpush1.xpose.msra.mxu0 0.0
        %937 = vmatprep.subr.mxu0 0.0
        %938 = vmatpush1.xpose.msra.mxu0 0.0
        %939 = vmatprep.subr.mxu0 0.0
        %940 = vmatpush1.xpose.msra.mxu0 0.0
        %941 = vmatprep.subr.mxu0 0.0
        %942 = vmatpush1.xpose.msra.mxu0 0.0
        %943 = vmatprep.subr.mxu0 0.0
        %944 = vmatpush1.xpose.msra.mxu0 0.0
        %945 = vmatprep.subr.mxu0 0.0
        %946 = vmatpush1.xpose.msra.mxu0 0.0
        %947 = vmatprep.subr.mxu0 0.0
        %948 = vmatpush1.xpose.msra.mxu0 0.0
        %949 = vmatprep.subr.mxu0 0.0
        %950 = vmatpush1.xpose.msra.mxu0 %v917
        %951 = vmatprep.subr.mxu0 0.0
        %952 = vmatpush2.xpose.msra.mxu0 0.0
        %953 = vmatprep.subr.mxu0 0.0
        %954 = vmatpush2.xpose.msra.mxu0 0.0
        %955 = vmatprep.subr.mxu0 0.0
        %956 = vmatpush2.xpose.msra.mxu0 0.0
        %957 = vmatprep.subr.mxu0 0.0
        %958 = vmatpush2.xpose.msra.mxu0 0.0
        %959 = vmatprep.subr.mxu0 0.0
        %960 = vmatpush2.xpose.msra.mxu0 0.0
        %961 = vmatprep.subr.mxu0 0.0
        %962 = vmatpush2.xpose.msra.mxu0 0.0
        %963 = vmatprep.subr.mxu0 0.0
        %964 = vmatpush2.xpose.msra.mxu0 0.0
        %965 = vmatprep.subr.mxu0 0.0
        %966 = vmatpush2.xpose.msra.mxu0 0.0
        %967 = vmatprep.subr.mxu0 0.0
        %968 = vmatpush2.xpose.msra.mxu0 0.0
        %969 = vmatprep.subr.mxu0 0.0
        %970 = vmatpush2.xpose.msra.mxu0 0.0
        %971 = vmatprep.subr.mxu0 0.0
        %972 = vmatpush2.xpose.msra.mxu0 0.0
        %973 = vmatprep.subr.mxu0 0.0
        %974 = vmatpush2.xpose.msra.mxu0 0.0
        %975 = vmatprep.subr.mxu0 0.0
        %976 = vmatpush2.xpose.msra.mxu0 0.0
        %977 = vmatprep.subr.mxu0 0.0
        %978 = vmatpush2.xpose.msra.mxu0 0.0
        %979 = vmatprep.subr.mxu0 0.0
        %980 = vmatpush2.xpose.msra.mxu0 0.0
        %981 = vmatprep.subr.mxu0 0.0
        %982 = vmatpush2.xpose.msra.mxu0 0.0
        %983 = vmatprep.mubr.f32.mxu0 0.0
        %984 = vmatmul.mubr.f32.gmra.mxu0 %v915
        %v985 = vpop.f32.mrf.mxu0
        %v986 = vadd.f32 0.0, %v985
        %v987 = vpop.f32.mrf.mxu0
        %988 = vdwg.mxu0
        %v989 = vmul.f32 %v986, 0.35355338
        %v990 = vsel %vm401, %v989, -inf
        %991 = vmax.xlane.f32.xlu0 %v990
        %v992 = vpop.xlane.xlu0 %991
        %v993 = vsub.f32 %v989, %v992
        %v994 = vmul.f32 %v993, 1.442695
        %v995 = vpow.pop %v994
        %v996 = vsel %vm401, %v995, 0.0
        %997 = vadd.xlane.f32.xlu0 %v996
        %v998 = vpop.xlane.xlu0 %997
        %999 = vrot.lane.b32.xlu0 %v400, 72
        %v1000 = vpop.permute.xlu0 %999
        %v1003 = vsel %vm401, %v995, 0
        %1005 = vmatprep.subr.mxu0 0.0
        %1006 = vmatpush1.msra.mxu0 0.0
        %1007 = vmatprep.subr.mxu0 0.0
        %1008 = vmatpush1.msra.mxu0 0.0
        %1009 = vmatprep.subr.mxu0 0.0
        %1010 = vmatpush1.msra.mxu0 0.0
        %1011 = vmatprep.subr.mxu0 0.0
        %1012 = vmatpush1.msra.mxu0 0.0
        %1013 = vmatprep.subr.mxu0 0.0
        %1014 = vmatpush1.msra.mxu0 0.0
        %1015 = vmatprep.subr.mxu0 0.0
        %1016 = vmatpush1.msra.mxu0 0.0
        %1017 = vmatprep.subr.mxu0 0.0
        %1018 = vmatpush1.msra.mxu0 0.0
        %1019 = vmatprep.subr.mxu0 0.0
        %1020 = vmatpush1.msra.mxu0 0.0
        %1021 = vmatprep.subr.mxu0 0.0
        %1022 = vmatpush1.msra.mxu0 0.0
        %1023 = vmatprep.subr.mxu0 0.0
        %1024 = vmatpush1.msra.mxu0 0.0
        %1025 = vmatprep.subr.mxu0 0.0
        %1026 = vmatpush1.msra.mxu0 0.0
        %1027 = vmatprep.subr.mxu0 0.0
        %1028 = vmatpush1.msra.mxu0 0.0
        %1029 = vmatprep.subr.mxu0 0.0
        %1030 = vmatpush1.msra.mxu0 0.0
        %1031 = vmatprep.subr.mxu0 0.0
        %1032 = vmatpush1.msra.mxu0 0.0
        %1033 = vmatprep.subr.mxu0 0.0
        %1034 = vmatpush1.msra.mxu0 0.0
        %1035 = vmatprep.subr.mxu0 0.0
        %1036 = vmatpush1.msra.mxu0 %v1000
        %1037 = vmatprep.subr.mxu0 0.0
        %1038 = vmatpush2.msra.mxu0 0.0
        %1039 = vmatprep.subr.mxu0 0.0
        %1040 = vmatpush2.msra.mxu0 0.0
        %1041 = vmatprep.subr.mxu0 0.0
        %1042 = vmatpush2.msra.mxu0 0.0
        %1043 = vmatprep.subr.mxu0 0.0
        %1044 = vmatpush2.msra.mxu0 0.0
        %1045 = vmatprep.subr.mxu0 0.0
        %1046 = vmatpush2.msra.mxu0 0.0
        %1047 = vmatprep.subr.mxu0 0.0
        %1048 = vmatpush2.msra.mxu0 0.0
        %1049 = vmatprep.subr.mxu0 0.0
        %1050 = vmatpush2.msra.mxu0 0.0
        %1051 = vmatprep.subr.mxu0 0.0
        %1052 = vmatpush2.msra.mxu0 0.0
        %1053 = vmatprep.subr.mxu0 0.0
        %1054 = vmatpush2.msra.mxu0 0.0
        %1055 = vmatprep.subr.mxu0 0.0
        %1056 = vmatpush2.msra.mxu0 0.0
        %1057 = vmatprep.subr.mxu0 0.0
        %1058 = vmatpush2.msra.mxu0 0.0
        %1059 = vmatprep.subr.mxu0 0.0
        %1060 = vmatpush2.msra.mxu0 0.0
        %1061 = vmatprep.subr.mxu0 0.0
        %1062 = vmatpush2.msra.mxu0 0.0
        %1063 = vmatprep.subr.mxu0 0.0
        %1064 = vmatpush2.msra.mxu0 0.0
        %1065 = vmatprep.subr.mxu0 0.0
        %1066 = vmatpush2.msra.mxu0 0.0
        %1067 = vmatprep.subr.mxu0 0.0
        %1068 = vmatpush2.msra.mxu0 0.0
        %1069 = vmatprep.mubr.f32.mxu0 0.0
        %1070 = vmatmul.mubr.f32.gmra.mxu0 %v1003
        %v1071 = vpop.f32.mrf.mxu0
        %v1072 = vadd.f32 0.0, %v1071
        %v1073 = vpop.f32.mrf.mxu0
        %1074 = vdwg.mxu0
        %v1075 = vrcp.pop %v998
        %v1076 = vmul.f32 %v1072, %v1075
        %1078 = vrot.lane.b32.xlu0 %v1076, 24
        %v1079 = vpop.permute.xlu0 %1078
        %vm1081 = vcmask 261312
        %1082 = vst.msk [vmem:[#allocation4] sm:$0xff] %vm1081, %v1079
        %v1083 = vld [vmem:[#allocation4] sm:$0xff]
        %v1084 = vld [vmem:[%s3] sm:$0xff]
        %v1085 = vld [vmem:[%s3 + $0x8] sm:$0xff]
        %v1086 = vld [vmem:[%s3 + $0x10] sm:$0xff]
        %v1087 = vld [vmem:[%s3 + $0x18] sm:$0xff]
        %vm1088 = vcmask 261120
        %v1090 = vsel %vm1088, %v1083, 0
        %1092 = vmatprep.subr.mxu0 0.0
        %1093 = vmatpush1.msra.mxu0 0.0
        %1094 = vmatprep.subr.mxu0 0.0
        %1095 = vmatpush1.msra.mxu0 0.0
        %1096 = vmatprep.subr.mxu0 0.0
        %1097 = vmatpush1.msra.mxu0 0.0
        %1098 = vmatprep.subr.mxu0 0.0
        %1099 = vmatpush1.msra.mxu0 0.0
        %1100 = vmatprep.subr.mxu0 0.0
        %1101 = vmatpush1.msra.mxu0 0.0
        %1102 = vmatprep.subr.mxu0 0.0
        %1103 = vmatpush1.msra.mxu0 0.0
        %1104 = vmatprep.subr.mxu0 0.0
        %1105 = vmatpush1.msra.mxu0 0.0
        %1106 = vmatprep.subr.mxu0 0.0
        %1107 = vmatpush1.msra.mxu0 0.0
        %1108 = vmatprep.subr.mxu0 0.0
        %1109 = vmatpush1.msra.mxu0 0.0
        %1110 = vmatprep.subr.mxu0 0.0
        %1111 = vmatpush1.msra.mxu0 0.0
        %1112 = vmatprep.subr.mxu0 0.0
        %1113 = vmatpush1.msra.mxu0 0.0
        %1114 = vmatprep.subr.mxu0 0.0
        %1115 = vmatpush1.msra.mxu0 0.0
        %1116 = vmatprep.subr.mxu0 0.0
        %1117 = vmatpush1.msra.mxu0 %v1087
        %1118 = vmatprep.subr.mxu0 0.0
        %1119 = vmatpush1.msra.mxu0 %v1086
        %1120 = vmatprep.subr.mxu0 0.0
        %1121 = vmatpush1.msra.mxu0 %v1085
        %1122 = vmatprep.subr.mxu0 0.0
        %1123 = vmatpush1.msra.mxu0 %v1084
        %1124 = vmatprep.subr.mxu0 0.0
        %1125 = vmatpush2.msra.mxu0 0.0
        %1126 = vmatprep.subr.mxu0 0.0
        %1127 = vmatpush2.msra.mxu0 0.0
        %1128 = vmatprep.subr.mxu0 0.0
        %1129 = vmatpush2.msra.mxu0 0.0
        %1130 = vmatprep.subr.mxu0 0.0
        %1131 = vmatpush2.msra.mxu0 0.0
        %1132 = vmatprep.subr.mxu0 0.0
        %1133 = vmatpush2.msra.mxu0 0.0
        %1134 = vmatprep.subr.mxu0 0.0
        %1135 = vmatpush2.msra.mxu0 0.0
        %1136 = vmatprep.subr.mxu0 0.0
        %1137 = vmatpush2.msra.mxu0 0.0
        %1138 = vmatprep.subr.mxu0 0.0
        %1139 = vmatpush2.msra.mxu0 0.0
        %1140 = vmatprep.subr.mxu0 0.0
        %1141 = vmatpush2.msra.mxu0 0.0
        %1142 = vmatprep.subr.mxu0 0.0
        %1143 = vmatpush2.msra.mxu0 0.0
        %1144 = vmatprep.subr.mxu0 0.0
        %1145 = vmatpush2.msra.mxu0 0.0
        %1146 = vmatprep.subr.mxu0 0.0
        %1147 = vmatpush2.msra.mxu0 0.0
        %1148 = vmatprep.subr.mxu0 0.0
        %1149 = vmatpush2.msra.mxu0 0.0
        %1150 = vmatprep.subr.mxu0 0.0
        %1151 = vmatpush2.msra.mxu0 0.0
        %1152 = vmatprep.subr.mxu0 0.0
        %1153 = vmatpush2.msra.mxu0 0.0
        %1154 = vmatprep.subr.mxu0 0.0
        %1155 = vmatpush2.msra.mxu0 0.0
        %1156 = vmatprep.mubr.f32.mxu0 0.0
        %1157 = vmatmul.mubr.f32.gmra.mxu0 %v1090
        %v1158 = vpop.f32.mrf.mxu0
        %v1159 = vadd.f32 0.0, %v1158
        %v1160 = vpop.f32.mrf.mxu0
        %1161 = vdwg.mxu0
        %v1162 = vadd.f32 %v397, %v1159
        %v1163 = vmul.f32 %v397, %v397
        %v1164 = vsel %vm1088, %v1163, 0.0
        %1165 = vadd.xlane.f32.xlu0 %v1164
        %v1166 = vpop.xlane.xlu0 %1165
        %v1167 = vrcp.pop 32.0
        %v1168 = vmul.f32 %v1166, %v1167
        %v1169 = vadd.f32 %v1168, 1e-06
        %v1170 = vrsqrt.pop %v1169
        %v1171 = vmul.f32 %v397, %v1170
        %v1172 = vld [vmem:[%s4] sm:$0x1]
        %v1174 = vlaneseq
        %v1175 = vshrl.u32 %v1174, 7
        %v1176 = vsub.s32 0, %v1175
        %v1177 = vrot.slane %v1172, %v1176
        %v1179 = vmul.f32 %v1171, %v1177
        %v1180 = vld [vmem:[%s5] sm:$0xff]
        %v1181 = vld [vmem:[%s5 + $0x8] sm:$0xff]
        %v1182 = vld [vmem:[%s5 + $0x10] sm:$0xff]
        %v1183 = vld [vmem:[%s5 + $0x18] sm:$0xff]
        %v1184 = vld [vmem:[%s5 + $0x20] sm:$0xff]
        %v1185 = vld [vmem:[%s5 + $0x28] sm:$0xff]
        %v1186 = vld [vmem:[%s5 + $0x30] sm:$0xff]
        %v1187 = vld [vmem:[%s5 + $0x38] sm:$0xff]
        %v1189 = vsel %vm1088, %v1179, 0
        %1191 = vmatprep.subr.mxu0 0.0
        %1192 = vmatpush1.msra.mxu0 0.0
        %1193 = vmatprep.subr.mxu0 0.0
        %1194 = vmatpush1.msra.mxu0 0.0
        %1195 = vmatprep.subr.mxu0 0.0
        %1196 = vmatpush1.msra.mxu0 0.0
        %1197 = vmatprep.subr.mxu0 0.0
        %1198 = vmatpush1.msra.mxu0 0.0
        %1199 = vmatprep.subr.mxu0 0.0
        %1200 = vmatpush1.msra.mxu0 0.0
        %1201 = vmatprep.subr.mxu0 0.0
        %1202 = vmatpush1.msra.mxu0 0.0
        %1203 = vmatprep.subr.mxu0 0.0
        %1204 = vmatpush1.msra.mxu0 0.0
        %1205 = vmatprep.subr.mxu0 0.0
        %1206 = vmatpush1.msra.mxu0 0.0
        %1207 = vmatprep.subr.mxu0 0.0
        %1208 = vmatpush1.msra.mxu0 0.0
        %1209 = vmatprep.subr.mxu0 0.0
        %1210 = vmatpush1.msra.mxu0 0.0
        %1211 = vmatprep.subr.mxu0 0.0
        %1212 = vmatpush1.msra.mxu0 0.0
        %1213 = vmatprep.subr.mxu0 0.0
        %1214 = vmatpush1.msra.mxu0 0.0
        %1215 = vmatprep.subr.mxu0 %v1187
        %1216 = vmatpush1.msra.mxu0 %v1186
        %1217 = vmatprep.subr.mxu0 %v1185
        %1218 = vmatpush1.msra.mxu0 %v1184
        %1219 = vmatprep.subr.mxu0 %v1183
        %1220 = vmatpush1.msra.mxu0 %v1182
        %1221 = vmatprep.subr.mxu0 %v1181
        %1222 = vmatpush1.msra.mxu0 %v1180
        %1223 = vmatprep.subr.mxu0 0.0
        %1224 = vmatpush2.msra.mxu0 0.0
        %1225 = vmatprep.subr.mxu0 0.0
        %1226 = vmatpush2.msra.mxu0 0.0
        %1227 = vmatprep.subr.mxu0 0.0
        %1228 = vmatpush2.msra.mxu0 0.0
        %1229 = vmatprep.subr.mxu0 0.0
        %1230 = vmatpush2.msra.mxu0 0.0
        %1231 = vmatprep.subr.mxu0 0.0
        %1232 = vmatpush2.msra.mxu0 0.0
        %1233 = vmatprep.subr.mxu0 0.0
        %1234 = vmatpush2.msra.mxu0 0.0
        %1235 = vmatprep.subr.mxu0 0.0
        %1236 = vmatpush2.msra.mxu0 0.0
        %1237 = vmatprep.subr.mxu0 0.0
        %1238 = vmatpush2.msra.mxu0 0.0
        %1239 = vmatprep.subr.mxu0 0.0
        %1240 = vmatpush2.msra.mxu0 0.0
        %1241 = vmatprep.subr.mxu0 0.0
        %1242 = vmatpush2.msra.mxu0 0.0
        %1243 = vmatprep.subr.mxu0 0.0
        %1244 = vmatpush2.msra.mxu0 0.0
        %1245 = vmatprep.subr.mxu0 0.0
        %1246 = vmatpush2.msra.mxu0 0.0
        %1247 = vmatprep.subr.mxu0 0.0
        %1248 = vmatpush2.msra.mxu0 0.0
        %1249 = vmatprep.subr.mxu0 0.0
        %1250 = vmatpush2.msra.mxu0 0.0
        %1251 = vmatprep.subr.mxu0 0.0
        %1252 = vmatpush2.msra.mxu0 0.0
        %1253 = vmatprep.subr.mxu0 0.0
        %1254 = vmatpush2.msra.mxu0 0.0
        %1255 = vmatprep.mubr.f32.mxu0 0.0
        %1256 = vmatmul.mubr.f32.gmra.mxu0 %v1189
        %v1257 = vpop.f32.mrf.mxu0
        %v1258 = vadd.f32 0.0, %v1257
        %v1259 = vpop.f32.mrf.mxu0
        %v1260 = vadd.f32 0.0, %v1259
        %1261 = vdwg.mxu0
        %v1262 = vxor.u32 %v1258, 2147483648
        %v1263 = vmul.f32 %v1262, 1.442695
        %v1264 = vpow.pop %v1263
        %v1265 = vadd.f32 %v1264, 1.0
        %v1266 = vrcp.pop %v1265
        %v1267 = vmul.f32 1.0, %v1266
        %v1268 = vmul.f32 %v1258, %v1267
        %v1269 = vmul.f32 %v1268, %v1260
        %v1270 = vld [vmem:[%s6] sm:$0xff]
        %v1271 = vld [vmem:[%s6 + $0x8] sm:$0xff]
        %v1272 = vld [vmem:[%s6 + $0x10] sm:$0xff]
        %v1273 = vld [vmem:[%s6 + $0x18] sm:$0xff]
        %v1274 = vld [vmem:[%s6 + $0x20] sm:$0xff]
        %v1275 = vld [vmem:[%s6 + $0x28] sm:$0xff]
        %v1276 = vld [vmem:[%s6 + $0x30] sm:$0xff]
        %v1277 = vld [vmem:[%s6 + $0x38] sm:$0xff]
        %v1278 = vld [vmem:[%s6 + $0x40] sm:$0xff]
        %v1279 = vld [vmem:[%s6 + $0x48] sm:$0xff]
        %v1280 = vld [vmem:[%s6 + $0x50] sm:$0xff]
        %v1281 = vld [vmem:[%s6 + $0x58] sm:$0xff]
        %v1282 = vld [vmem:[%s6 + $0x60] sm:$0xff]
        %v1283 = vld [vmem:[%s6 + $0x68] sm:$0xff]
        %v1284 = vld [vmem:[%s6 + $0x70] sm:$0xff]
        %v1285 = vld [vmem:[%s6 + $0x78] sm:$0xff]
        %1286 = vmatprep.subr.mxu0 0.0
        %1287 = vmatpush1.msra.mxu0 %v1285
        %1288 = vmatprep.subr.mxu0 0.0
        %1289 = vmatpush1.msra.mxu0 %v1284
        %1290 = vmatprep.subr.mxu0 0.0
        %1291 = vmatpush1.msra.mxu0 %v1283
        %1292 = vmatprep.subr.mxu0 0.0
        %1293 = vmatpush1.msra.mxu0 %v1282
        %1294 = vmatprep.subr.mxu0 0.0
        %1295 = vmatpush1.msra.mxu0 %v1281
        %1296 = vmatprep.subr.mxu0 0.0
        %1297 = vmatpush1.msra.mxu0 %v1280
        %1298 = vmatprep.subr.mxu0 0.0
        %1299 = vmatpush1.msra.mxu0 %v1279
        %1300 = vmatprep.subr.mxu0 0.0
        %1301 = vmatpush1.msra.mxu0 %v1278
        %1302 = vmatprep.subr.mxu0 0.0
        %1303 = vmatpush1.msra.mxu0 %v1277
        %1304 = vmatprep.subr.mxu0 0.0
        %1305 = vmatpush1.msra.mxu0 %v1276
        %1306 = vmatprep.subr.mxu0 0.0
        %1307 = vmatpush1.msra.mxu0 %v1275
        %1308 = vmatprep.subr.mxu0 0.0
        %1309 = vmatpush1.msra.mxu0 %v1274
        %1310 = vmatprep.subr.mxu0 0.0
        %1311 = vmatpush1.msra.mxu0 %v1273
        %1312 = vmatprep.subr.mxu0 0.0
        %1313 = vmatpush1.msra.mxu0 %v1272
        %1314 = vmatprep.subr.mxu0 0.0
        %1315 = vmatpush1.msra.mxu0 %v1271
        %1316 = vmatprep.subr.mxu0 0.0
        %1317 = vmatpush1.msra.mxu0 %v1270
        %1318 = vmatprep.subr.mxu0 0.0
        %1319 = vmatpush2.msra.mxu0 0.0
        %1320 = vmatprep.subr.mxu0 0.0
        %1321 = vmatpush2.msra.mxu0 0.0
        %1322 = vmatprep.subr.mxu0 0.0
        %1323 = vmatpush2.msra.mxu0 0.0
        %1324 = vmatprep.subr.mxu0 0.0
        %1325 = vmatpush2.msra.mxu0 0.0
        %1326 = vmatprep.subr.mxu0 0.0
        %1327 = vmatpush2.msra.mxu0 0.0
        %1328 = vmatprep.subr.mxu0 0.0
        %1329 = vmatpush2.msra.mxu0 0.0
        %1330 = vmatprep.subr.mxu0 0.0
        %1331 = vmatpush2.msra.mxu0 0.0
        %1332 = vmatprep.subr.mxu0 0.0
        %1333 = vmatpush2.msra.mxu0 0.0
        %1334 = vmatprep.subr.mxu0 0.0
        %1335 = vmatpush2.msra.mxu0 0.0
        %1336 = vmatprep.subr.mxu0 0.0
        %1337 = vmatpush2.msra.mxu0 0.0
        %1338 = vmatprep.subr.mxu0 0.0
        %1339 = vmatpush2.msra.mxu0 0.0
        %1340 = vmatprep.subr.mxu0 0.0
        %1341 = vmatpush2.msra.mxu0 0.0
        %1342 = vmatprep.subr.mxu0 0.0
        %1343 = vmatpush2.msra.mxu0 0.0
        %1344 = vmatprep.subr.mxu0 0.0
        %1345 = vmatpush2.msra.mxu0 0.0
        %1346 = vmatprep.subr.mxu0 0.0
        %1347 = vmatpush2.msra.mxu0 0.0
        %1348 = vmatprep.subr.mxu0 0.0
        %1349 = vmatpush2.msra.mxu0 0.0
        %1350 = vmatprep.mubr.f32.mxu0 0.0
        %1351 = vmatmul.mubr.f32.gmra.mxu0 %v1269
        %v1352 = vpop.f32.mrf.mxu0
        %v1353 = vadd.f32 0.0, %v1352
        %v1354 = vpop.f32.mrf.mxu0
        %1355 = vdwg.mxu0
        %v1356 = vadd.f32 %v1162, %v1353
        %1357 = vst.msk [vmem:[%s283] sm:$0xff] %vm1088, %v1356
        %s1358 = sand.u32 %s195, 1
        %s1359 = scalar_lea.sflag [#allocation6], %s1358
        %s1360 = sand.u32 %s195, 1
        %s1361 = smul.addr %s1360, 8
        %s1362 = scalar_lea.vmem [#allocation5], %s1361
        // Predicated region
        $region53: #{tpu_custom_call.1} parent=47 // pred_check
          %p1363 = pneg %p205
        $region54: #{tpu_custom_call.1} parent=47 // pred_check_branch
          %1365 = sbr.rel (%p1363) target = $region56
        $region55: #{tpu_custom_call.1} parent=47 // pred_region
          %s1367 = ssub.s32 128, 128
          %1368 = vsyncadd %s1359, %s1367
          %s1369 = sadd.s32 %s26, %s25
          %s1370 = smul.addr %s1369, 128
          %s1371 = scalar_lea.hbm %s7, %s1370
          %s1373 = sshll.u32 %s1362, 4
          %s1374 = int_to_ptr.vmem [resolvable:$true] %s1373
          %1376 = dma.vmem_to_hbm [thread:$0]  %s1374, 128, %s1371, %s1359
        $region56: #{tpu_custom_call.1} parent=47 // pred_fallthru
          _
      $region48: #{tpu_custom_call.1} parent=5 // pred_fallthru
        _
      %p1377 = scmp.le.s32.totalorder 2, %s16
      // Predicated region
      $region57: #{tpu_custom_call.1} parent=5 // pred_check
        %p1378 = pneg %p1377
      $region58: #{tpu_custom_call.1} parent=5 // pred_check_branch
        %1380 = sbr.rel (%p1378) target = $region60
      $region59: #{tpu_custom_call.1} parent=5 // pred_region
        %s1381 = ssub.s32 %s16, 2
        // Predicated region
        $region61: #{tpu_custom_call.1} parent=59 // pred_check
          %p1382 = pneg %p211
        $region62: #{tpu_custom_call.1} parent=59 // pred_check_branch
          %1384 = sbr.rel (%p1382) target = $region64
        $region63: #{tpu_custom_call.1} parent=59 // pred_region
          %s1385 = sand.u32 %s196, 1
          %s1386 = scalar_lea.sflag [#allocation6], %s1385
          %s1387 = sand.u32 %s196, 1
          %s1388 = smul.addr %s1387, 8
          %s1389 = scalar_lea.vmem [#allocation5], %s1388
          %1390 = dma.done %s1386, 128
        $region64: #{tpu_custom_call.1} parent=59 // pred_fallthru
          _
      $region60: #{tpu_custom_call.1} parent=5 // pred_fallthru
        _
    $region6: #{tpu_custom_call.1} parent=1 // loop_footer
      %s20 = sadd.s32 1, %s16
    $region7: #{tpu_custom_call.1} parent=1 // loop_footer_branch
      %15 = sbr.rel target = $region3
    $region8: #{tpu_custom_call.1} parent=1 // loop_exit
      _
    %1391 = vsyncpa [#allocation6], 1
    %s1392 = scalar_lea.sflag [#allocation6], 1
    %1393 = vsyncpa %s1392, 1

</llo_original>
